<compile_context>
chip_gen: v7x
topology: tpu7x:2x2x1
jax: 0.10.0
libtpu: 0.0.40
codegen_flags: <defaults>
</compile_context>

<pallas_src>
import functools

import jax
import jax.numpy as jnp
from jax.experimental import pallas as pl
from jax.experimental.pallas import tpu as pltpu  # noqa: F401  (no TPU-specific scratch needed at this size)


# ----------------------------------------------------------------------------
# Single fused kernel: 3x RelGraphConv(+tanh) -> GaussianProjection -> reparam
# -> user/item row-dot.  No grid: everything stays in VMEM/vregs.
# ----------------------------------------------------------------------------
def _fused_forward_kernel(afold_ref, x_ref, convw_ref, convb_ref,
                          w13_ref, b13_ref, w24_ref, b24_ref,
                          noise_ref, z_ref, scores_ref, *, n_users):
    num_layers = convw_ref.shape[0]
    num_bases = convw_ref.shape[1] - 1          # last slot of the weight slab = W_self
    f_out = convb_ref.shape[2]
    out_dim = z_ref.shape[1]

    # ---- 3x RelGraphConv (basis regularizer) + tanh -------------------------
    #   sum_r A[r] @ (h @ W_r) = sum_b A_fold[b] @ (h @ basis_b),
    #   A_fold[l, b] = sum_r comp_l[r, b] * A[r]   (precomputed once per layer).
    h = x_ref[...]                               # activations kept in f32
    states = []
    for l in range(num_layers):
        h_bf = h.astype(jnp.bfloat16)            # bf16 MXU operands, f32 accumulation
        acc = (jnp.dot(h_bf, convw_ref[l, num_bases],
                       preferred_element_type=jnp.float32)
               + convb_ref[l])                   # self-loop term + bias
        for b in range(num_bases):
            p = jnp.dot(h_bf, convw_ref[l, b], preferred_element_type=jnp.float32)
            acc = acc + jnp.dot(afold_ref[l, b], p.astype(jnp.bfloat16),
                                preferred_element_type=jnp.float32)
        h = jnp.tanh(acc)                        # VPU/EUP math stays f32 (v5e-safe)
        states.append(h)

    # ---- GaussianProjection, eval mode (Dropout(0.3) == identity) -----------
    # mean / log_std branches merged: W13 = [W1 | W3], W24 = blockdiag(W2, W4).
    # The (N, 96) concat of layer states is never materialized; the first-stage
    # matmul is decomposed over the three aligned 32-row blocks of W13.
    pre = b13_ref[...]
    for l in range(num_layers):
        pre = pre + jnp.dot(states[l].astype(jnp.bfloat16),
                            w13_ref[l * f_out:(l + 1) * f_out, :],
                            preferred_element_type=jnp.float32)
    h12 = jnp.maximum(pre, 0.0)                                         # (N, 2*hidden)
    mo = (jnp.dot(h12.astype(jnp.bfloat16), w24_ref[...],
                  preferred_element_type=jnp.float32) + b24_ref[...])
    mean = mo[:, :out_dim]                                              # lane-aligned slices
    log_std = mo[:, out_dim:]

    z = mean + noise_ref[...] * jnp.exp(log_std)                        # reparameterize (f32)
    z_ref[...] = z

    # ---- scores = (users_z * items_z).sum(dim=1) -----------------------------
    # users/items are contiguous row ranges; emitted as a zero-padded,
    # lane-dense (1, >=128) row so the final store is an unmasked vst.
    prod = z[:n_users, :] * z[n_users:2 * n_users, :]
    ones = jnp.ones((1, out_dim), jnp.float32)
    row = jax.lax.dot_general(ones, prod, (((1,), (1,)), ((), ())),
                              preferred_element_type=jnp.float32)       # (1, n_users)
    pad = scores_ref.shape[1]
    if pad > n_users:
        row = jnp.concatenate(
            [row, jnp.zeros((1, pad - n_users), jnp.float32)], axis=1)
    scores_ref[...] = row


# ----------------------------------------------------------------------------
# One-time graph / parameter re-layout (hoisted out of the per-call forward).
# ----------------------------------------------------------------------------
def prepare_inputs(x, adj, params, num_layers=3):
    n = x.shape[0]
    num_bases, in_feats, f_out = params["basis_0"].shape
    f_pad = f_out
    assert in_feats <= f_pad, "prep assumes in_feats <= latent width"

    # per-layer basis-folded adjacency: A_fold[l, b] = sum_r comp_l[r, b] * A[r]
    afold = jnp.stack(
        [jnp.einsum("rb,rnm->bnm", params[f"comp_{l}"], adj)
         for l in range(num_layers)], axis=0).astype(jnp.bfloat16)      # (L, B, N, N)

    # conv weights packed into one slab: slot b < B = basis_b, slot B = W_self;
    # layer-0 input rows zero-padded from in_feats to f_pad.
    convw = []
    for l in range(num_layers):
        w = jnp.concatenate([params[f"basis_{l}"],
                             params[f"w_self_{l}"][None]], axis=0)      # (B+1, f_in, f_out)
        f_in = w.shape[1]
        if f_in < f_pad:
            w = jnp.concatenate(
                [w, jnp.zeros((w.shape[0], f_pad - f_in, f_out), w.dtype)], axis=1)
        convw.append(w)
    convw = jnp.stack(convw, axis=0).astype(jnp.bfloat16)               # (L, B+1, f_pad, f_out)
    convb = jnp.stack([params[f"bias_{l}"] for l in range(num_layers)],
                      axis=0)                                           # (L, 1, f_out)

    # x zero-padded to f_pad columns (matches the zero-padded layer-0 weights).
    if x.shape[1] < f_pad:
        x = jnp.concatenate(
            [x, jnp.zeros((n, f_pad - x.shape[1]), x.dtype)], axis=1)

    hidden = params["gp_w1"].shape[1]
    out_dim = params["gp_w2"].shape[1]
    w13 = jnp.concatenate([params["gp_w1"], params["gp_w3"]],
                          axis=1).astype(jnp.bfloat16)                  # (3*f_out, 2*hidden)
    b13 = jnp.concatenate([params["gp_b1"], params["gp_b3"]], axis=1)   # (1, 2*hidden)
    w24 = jnp.zeros((2 * hidden, 2 * out_dim), jnp.float32)             # blockdiag(W2, W4)
    w24 = w24.at[:hidden, :out_dim].set(params["gp_w2"])
    w24 = w24.at[hidden:, out_dim:].set(params["gp_w4"])
    w24 = w24.astype(jnp.bfloat16)
    b24 = jnp.concatenate([params["gp_b2"], params["gp_b4"]], axis=1)   # (1, 2*out_dim)

    return {"afold": afold, "x": x, "convw": convw, "convb": convb,
            "w13": w13, "b13": b13, "w24": w24, "b24": b24}


# ----------------------------------------------------------------------------
# Full forward (eval mode, regression=True), jitted end-to-end.
# ----------------------------------------------------------------------------
@functools.partial(jax.jit, static_argnames=("n_users",))
def autoencoder_forward(prep, noise, *, n_users):
    n = prep["x"].shape[0]
    out_dim = prep["w24"].shape[1] // 2
    scores_pad = ((n_users + 127) // 128) * 128          # lane-dense scores row

    z, scores_row = pl.pallas_call(
        functools.partial(_fused_forward_kernel, n_users=n_users),
        out_shape=(jax.ShapeDtypeStruct((n, out_dim), jnp.float32),
                   jax.ShapeDtypeStruct((1, scores_pad), jnp.float32)),
        # TODO(synk): for realistic N, add a grid over destination-row tiles
        # ("parallel" for v7x's two TensorCores, folded-adjacency reduction axis
        # last) plus an explicit vmem_limit_bytes so A_fold streams through VMEM.
    )(prep["afold"], prep["x"], prep["convw"], prep["convb"],
      prep["w13"], prep["b13"], prep["w24"], prep["b24"], noise)

    # users are the first n_users rows, items the rest (static contiguous split;
    # the reference's boolean nlabel masks reduce to this and #items == #users
    # is assumed by its (users*items).sum(1)).
    # TODO(synk): interleaved nlabel masks would need an integer-index gather.
    users_z = z[:n_users]
    items_z = z[n_users:]
    results = jnp.concatenate([users_z, items_z], axis=0)
    scores = scores_row[0, :n_users]

    # TODO(synk): training-mode branch (DropEdge, Dropout(0.3), src/dst edge
    # preds via index gather) is not exercised; eval mode returns preds = 0.
    preds = 0
    return scores, preds, results


# ----------------------------------------------------------------------------
# Parameter construction (deterministic, synthetic).  basis/comp are kept
# separate (as in the actual RelGraphConv basis regularizer) so the adjacency
# fold can be precomputed.
# ----------------------------------------------------------------------------
def init_params(key, in_feats, latent_dim, num_relations, num_bases,
                output_vgae, hidden_dim):
    ks = iter(jax.random.split(key, 64))
    p = {}
    f_in = in_feats
    for layer, f_out in enumerate(latent_dim[:3]):
        p[f"basis_{layer}"] = 0.1 * jax.random.normal(
            next(ks), (num_bases, f_in, f_out), jnp.float32)
        p[f"comp_{layer}"] = 0.1 * jax.random.normal(
            next(ks), (num_relations, num_bases), jnp.float32)
        p[f"w_self_{layer}"] = 0.1 * jax.random.normal(next(ks), (f_in, f_out), jnp.float32)
        p[f"bias_{layer}"] = 0.1 * jax.random.normal(next(ks), (1, f_out), jnp.float32)
        f_in = f_out

    gp_in = 3 * latent_dim[0]
    p["gp_w1"] = 0.1 * jax.random.normal(next(ks), (gp_in, hidden_dim), jnp.float32)
    p["gp_b1"] = 0.1 * jax.random.normal(next(ks), (1, hidden_dim), jnp.float32)
    p["gp_w2"] = 0.1 * jax.random.normal(next(ks), (hidden_dim, output_vgae), jnp.float32)
    p["gp_b2"] = 0.1 * jax.random.normal(next(ks), (1, output_vgae), jnp.float32)
    p["gp_w3"] = 0.1 * jax.random.normal(next(ks), (gp_in, hidden_dim), jnp.float32)
    p["gp_b3"] = 0.1 * jax.random.normal(next(ks), (1, hidden_dim), jnp.float32)
    p["gp_w4"] = 0.1 * jax.random.normal(next(ks), (hidden_dim, output_vgae), jnp.float32)
    p["gp_b4"] = 0.1 * jax.random.normal(next(ks), (1, output_vgae), jnp.float32)
    # NOTE: lin1..lin4 are constructed in __init__ but never used in forward();
    # they are intentionally not materialized here.
    return p


if __name__ == "__main__":
    # small synthetic graph consistent with the module's defaults
    N = 16            # nodes
    E = 24            # edges
    R = 8             # num_relations
    B = 2             # num_bases
    IN_FEATS = 8
    LATENT = [32, 32, 32, 32]
    OUT_VGAE = 128
    HIDDEN = 32

    key = jax.random.PRNGKey(0)
    k_x, k_src, k_dst, k_et, k_noise, k_par = jax.random.split(key, 6)

    x = jax.random.normal(k_x, (N, IN_FEATS), jnp.float32)
    src = jax.random.randint(k_src, (E,), 0, N)
    dst = jax.random.randint(k_dst, (E,), 0, N)
    etype = jax.random.randint(k_et, (E,), 0, R)

    # dense per-relation adjacency A[r, dst, src]
    adj = jnp.zeros((R, N, N), jnp.float32)
    adj = adj.at[etype, dst, src].add(1.0)
    # dgl.add_self_loop models the new self-loop edges as identity in A[0];
    # RelGraphConv(self_loop=True) separately adds h @ W_self (both kept).
    adj = adj.at[0, jnp.arange(N), jnp.arange(N)].add(1.0)

    # first half of nodes are "users", second half "items"
    nlabel = jnp.concatenate(
        [jnp.tile(jnp.array([[1, 0]], jnp.int32), (N // 2, 1)),
         jnp.tile(jnp.array([[0, 1]], jnp.int32), (N // 2, 1))], axis=0)

    noise = jax.random.normal(k_noise, (N, OUT_VGAE), jnp.float32)
    params = init_params(k_par, IN_FEATS, LATENT, R, B, OUT_VGAE, HIDDEN)

    # users/items as a static contiguous split derived from nlabel
    n_users = int(jnp.sum(nlabel[:, 0] == 1))
    assert bool(jnp.all(nlabel[:n_users, 0] == 1))
    assert bool(jnp.all(nlabel[n_users:, 1] == 1))

    prep = prepare_inputs(x, adj, params)     # one-time graph/param re-layout
    scores, preds, results = autoencoder_forward(prep, noise, n_users=n_users)
    jax.block_until_ready(scores)
    jax.block_until_ready(results)

    assert scores.shape == (n_users,)
    assert results.shape == (N, OUT_VGAE)
    print("KERNEL_OK")
</pallas_src>

<mosaic_0001>
module attributes {stable_mosaic.version = 11 : i64} {
  func.func @_fused_forward_kernel(%arg0: memref<3x2x16x16xbf16, #tpu.memory_space<vmem>>, %arg1: memref<16x32xf32, #tpu.memory_space<vmem>>, %arg2: memref<3x3x32x32xbf16, #tpu.memory_space<vmem>>, %arg3: memref<3x1x32xf32, #tpu.memory_space<vmem>>, %arg4: memref<96x64xbf16, #tpu.memory_space<vmem>>, %arg5: memref<1x64xf32, #tpu.memory_space<vmem>>, %arg6: memref<64x256xbf16, #tpu.memory_space<vmem>>, %arg7: memref<1x256xf32, #tpu.memory_space<vmem>>, %arg8: memref<16x128xf32, #tpu.memory_space<vmem>>, %arg9: memref<16x128xf32, #tpu.memory_space<vmem>>, %arg10: memref<1x128xf32, #tpu.memory_space<vmem>>) attributes {dimension_semantics = [], scalar_prefetch = 0 : i64, scratch_operands = 0 : i64, tpu.core_type = #tpu.core_type<tc>} {
    %c0 = arith.constant 0 : index
    %c0_0 = arith.constant 0 : index
    %0 = vector.load %arg1[%c0, %c0_0] : memref<16x32xf32, #tpu.memory_space<vmem>>, vector<16x32xf32>
    %1 = arith.truncf %0 : vector<16x32xf32> to vector<16x32xbf16>
    %c0_1 = arith.constant 0 : index
    %c2 = arith.constant 2 : index
    %c0_2 = arith.constant 0 : index
    %c0_3 = arith.constant 0 : index
    %2 = vector.load %arg2[%c0_1, %c2, %c0_2, %c0_3] : memref<3x3x32x32xbf16, #tpu.memory_space<vmem>>, vector<1x1x32x32xbf16>
    %3 = vector.shape_cast %2 : vector<1x1x32x32xbf16> to vector<32x32xbf16>
    %cst = arith.constant dense<0.000000e+00> : vector<16x32xf32>
    %4 = tpu.matmul %1, %3, %cst {dimension_numbers = #tpu.dot_dimension_numbers<[1], [0], [0], [1], [0, 0, 1, 1], [], []>} : vector<16x32xbf16>, vector<32x32xbf16>, vector<16x32xf32> -> vector<16x32xf32>
    %c0_4 = arith.constant 0 : index
    %c0_5 = arith.constant 0 : index
    %c0_6 = arith.constant 0 : index
    %5 = vector.load %arg3[%c0_4, %c0_5, %c0_6] : memref<3x1x32xf32, #tpu.memory_space<vmem>>, vector<1x1x32xf32>
    %6 = vector.shape_cast %5 : vector<1x1x32xf32> to vector<1x32xf32>
    %7 = vector.broadcast %6 : vector<1x32xf32> to vector<16x32xf32>
    %8 = arith.addf %4, %7 : vector<16x32xf32>
    %c0_7 = arith.constant 0 : index
    %c0_8 = arith.constant 0 : index
    %c0_9 = arith.constant 0 : index
    %c0_10 = arith.constant 0 : index
    %9 = vector.load %arg2[%c0_7, %c0_8, %c0_9, %c0_10] : memref<3x3x32x32xbf16, #tpu.memory_space<vmem>>, vector<1x1x32x32xbf16>
    %10 = vector.shape_cast %9 : vector<1x1x32x32xbf16> to vector<32x32xbf16>
    %cst_11 = arith.constant dense<0.000000e+00> : vector<16x32xf32>
    %11 = tpu.matmul %1, %10, %cst_11 {dimension_numbers = #tpu.dot_dimension_numbers<[1], [0], [0], [1], [0, 0, 1, 1], [], []>} : vector<16x32xbf16>, vector<32x32xbf16>, vector<16x32xf32> -> vector<16x32xf32>
    %c0_12 = arith.constant 0 : index
    %c0_13 = arith.constant 0 : index
    %c0_14 = arith.constant 0 : index
    %c0_15 = arith.constant 0 : index
    %12 = vector.load %arg0[%c0_12, %c0_13, %c0_14, %c0_15] : memref<3x2x16x16xbf16, #tpu.memory_space<vmem>>, vector<1x1x16x16xbf16>
    %13 = vector.shape_cast %12 : vector<1x1x16x16xbf16> to vector<16x16xbf16>
    %14 = arith.truncf %11 : vector<16x32xf32> to vector<16x32xbf16>
    %cst_16 = arith.constant dense<0.000000e+00> : vector<16x32xf32>
    %15 = tpu.matmul %13, %14, %cst_16 {dimension_numbers = #tpu.dot_dimension_numbers<[1], [0], [0], [1], [0, 0, 1, 1], [], []>} : vector<16x16xbf16>, vector<16x32xbf16>, vector<16x32xf32> -> vector<16x32xf32>
    %16 = arith.addf %8, %15 : vector<16x32xf32>
    %c0_17 = arith.constant 0 : index
    %c1 = arith.constant 1 : index
    %c0_18 = arith.constant 0 : index
    %c0_19 = arith.constant 0 : index
    %17 = vector.load %arg2[%c0_17, %c1, %c0_18, %c0_19] : memref<3x3x32x32xbf16, #tpu.memory_space<vmem>>, vector<1x1x32x32xbf16>
    %18 = vector.shape_cast %17 : vector<1x1x32x32xbf16> to vector<32x32xbf16>
    %cst_20 = arith.constant dense<0.000000e+00> : vector<16x32xf32>
    %19 = tpu.matmul %1, %18, %cst_20 {dimension_numbers = #tpu.dot_dimension_numbers<[1], [0], [0], [1], [0, 0, 1, 1], [], []>} : vector<16x32xbf16>, vector<32x32xbf16>, vector<16x32xf32> -> vector<16x32xf32>
    %c0_21 = arith.constant 0 : index
    %c1_22 = arith.constant 1 : index
    %c0_23 = arith.constant 0 : index
    %c0_24 = arith.constant 0 : index
    %20 = vector.load %arg0[%c0_21, %c1_22, %c0_23, %c0_24] : memref<3x2x16x16xbf16, #tpu.memory_space<vmem>>, vector<1x1x16x16xbf16>
    %21 = vector.shape_cast %20 : vector<1x1x16x16xbf16> to vector<16x16xbf16>
    %22 = arith.truncf %19 : vector<16x32xf32> to vector<16x32xbf16>
    %cst_25 = arith.constant dense<0.000000e+00> : vector<16x32xf32>
    %23 = tpu.matmul %21, %22, %cst_25 {dimension_numbers = #tpu.dot_dimension_numbers<[1], [0], [0], [1], [0, 0, 1, 1], [], []>} : vector<16x16xbf16>, vector<16x32xbf16>, vector<16x32xf32> -> vector<16x32xf32>
    %24 = arith.addf %16, %23 : vector<16x32xf32>
    %25 = math.tanh %24 : vector<16x32xf32>
    %26 = arith.truncf %25 : vector<16x32xf32> to vector<16x32xbf16>
    %c1_26 = arith.constant 1 : index
    %c2_27 = arith.constant 2 : index
    %c0_28 = arith.constant 0 : index
    %c0_29 = arith.constant 0 : index
    %27 = vector.load %arg2[%c1_26, %c2_27, %c0_28, %c0_29] : memref<3x3x32x32xbf16, #tpu.memory_space<vmem>>, vector<1x1x32x32xbf16>
    %28 = vector.shape_cast %27 : vector<1x1x32x32xbf16> to vector<32x32xbf16>
    %cst_30 = arith.constant dense<0.000000e+00> : vector<16x32xf32>
    %29 = tpu.matmul %26, %28, %cst_30 {dimension_numbers = #tpu.dot_dimension_numbers<[1], [0], [0], [1], [0, 0, 1, 1], [], []>} : vector<16x32xbf16>, vector<32x32xbf16>, vector<16x32xf32> -> vector<16x32xf32>
    %c1_31 = arith.constant 1 : index
    %c0_32 = arith.constant 0 : index
    %c0_33 = arith.constant 0 : index
    %30 = vector.load %arg3[%c1_31, %c0_32, %c0_33] : memref<3x1x32xf32, #tpu.memory_space<vmem>>, vector<1x1x32xf32>
    %31 = vector.shape_cast %30 : vector<1x1x32xf32> to vector<1x32xf32>
    %32 = vector.broadcast %31 : vector<1x32xf32> to vector<16x32xf32>
    %33 = arith.addf %29, %32 : vector<16x32xf32>
    %c1_34 = arith.constant 1 : index
    %c0_35 = arith.constant 0 : index
    %c0_36 = arith.constant 0 : index
    %c0_37 = arith.constant 0 : index
    %34 = vector.load %arg2[%c1_34, %c0_35, %c0_36, %c0_37] : memref<3x3x32x32xbf16, #tpu.memory_space<vmem>>, vector<1x1x32x32xbf16>
    %35 = vector.shape_cast %34 : vector<1x1x32x32xbf16> to vector<32x32xbf16>
    %cst_38 = arith.constant dense<0.000000e+00> : vector<16x32xf32>
    %36 = tpu.matmul %26, %35, %cst_38 {dimension_numbers = #tpu.dot_dimension_numbers<[1], [0], [0], [1], [0, 0, 1, 1], [], []>} : vector<16x32xbf16>, vector<32x32xbf16>, vector<16x32xf32> -> vector<16x32xf32>
    %c1_39 = arith.constant 1 : index
    %c0_40 = arith.constant 0 : index
    %c0_41 = arith.constant 0 : index
    %c0_42 = arith.constant 0 : index
    %37 = vector.load %arg0[%c1_39, %c0_40, %c0_41, %c0_42] : memref<3x2x16x16xbf16, #tpu.memory_space<vmem>>, vector<1x1x16x16xbf16>
    %38 = vector.shape_cast %37 : vector<1x1x16x16xbf16> to vector<16x16xbf16>
    %39 = arith.truncf %36 : vector<16x32xf32> to vector<16x32xbf16>
    %cst_43 = arith.constant dense<0.000000e+00> : vector<16x32xf32>
    %40 = tpu.matmul %38, %39, %cst_43 {dimension_numbers = #tpu.dot_dimension_numbers<[1], [0], [0], [1], [0, 0, 1, 1], [], []>} : vector<16x16xbf16>, vector<16x32xbf16>, vector<16x32xf32> -> vector<16x32xf32>
    %41 = arith.addf %33, %40 : vector<16x32xf32>
    %c1_44 = arith.constant 1 : index
    %c1_45 = arith.constant 1 : index
    %c0_46 = arith.constant 0 : index
    %c0_47 = arith.constant 0 : index
    %42 = vector.load %arg2[%c1_44, %c1_45, %c0_46, %c0_47] : memref<3x3x32x32xbf16, #tpu.memory_space<vmem>>, vector<1x1x32x32xbf16>
    %43 = vector.shape_cast %42 : vector<1x1x32x32xbf16> to vector<32x32xbf16>
    %cst_48 = arith.constant dense<0.000000e+00> : vector<16x32xf32>
    %44 = tpu.matmul %26, %43, %cst_48 {dimension_numbers = #tpu.dot_dimension_numbers<[1], [0], [0], [1], [0, 0, 1, 1], [], []>} : vector<16x32xbf16>, vector<32x32xbf16>, vector<16x32xf32> -> vector<16x32xf32>
    %c1_49 = arith.constant 1 : index
    %c1_50 = arith.constant 1 : index
    %c0_51 = arith.constant 0 : index
    %c0_52 = arith.constant 0 : index
    %45 = vector.load %arg0[%c1_49, %c1_50, %c0_51, %c0_52] : memref<3x2x16x16xbf16, #tpu.memory_space<vmem>>, vector<1x1x16x16xbf16>
    %46 = vector.shape_cast %45 : vector<1x1x16x16xbf16> to vector<16x16xbf16>
    %47 = arith.truncf %44 : vector<16x32xf32> to vector<16x32xbf16>
    %cst_53 = arith.constant dense<0.000000e+00> : vector<16x32xf32>
    %48 = tpu.matmul %46, %47, %cst_53 {dimension_numbers = #tpu.dot_dimension_numbers<[1], [0], [0], [1], [0, 0, 1, 1], [], []>} : vector<16x16xbf16>, vector<16x32xbf16>, vector<16x32xf32> -> vector<16x32xf32>
    %49 = arith.addf %41, %48 : vector<16x32xf32>
    %50 = math.tanh %49 : vector<16x32xf32>
    %51 = arith.truncf %50 : vector<16x32xf32> to vector<16x32xbf16>
    %c2_54 = arith.constant 2 : index
    %c2_55 = arith.constant 2 : index
    %c0_56 = arith.constant 0 : index
    %c0_57 = arith.constant 0 : index
    %52 = vector.load %arg2[%c2_54, %c2_55, %c0_56, %c0_57] : memref<3x3x32x32xbf16, #tpu.memory_space<vmem>>, vector<1x1x32x32xbf16>
    %53 = vector.shape_cast %52 : vector<1x1x32x32xbf16> to vector<32x32xbf16>
    %cst_58 = arith.constant dense<0.000000e+00> : vector<16x32xf32>
    %54 = tpu.matmul %51, %53, %cst_58 {dimension_numbers = #tpu.dot_dimension_numbers<[1], [0], [0], [1], [0, 0, 1, 1], [], []>} : vector<16x32xbf16>, vector<32x32xbf16>, vector<16x32xf32> -> vector<16x32xf32>
    %c2_59 = arith.constant 2 : index
    %c0_60 = arith.constant 0 : index
    %c0_61 = arith.constant 0 : index
    %55 = vector.load %arg3[%c2_59, %c0_60, %c0_61] : memref<3x1x32xf32, #tpu.memory_space<vmem>>, vector<1x1x32xf32>
    %56 = vector.shape_cast %55 : vector<1x1x32xf32> to vector<1x32xf32>
    %57 = vector.broadcast %56 : vector<1x32xf32> to vector<16x32xf32>
    %58 = arith.addf %54, %57 : vector<16x32xf32>
    %c2_62 = arith.constant 2 : index
    %c0_63 = arith.constant 0 : index
    %c0_64 = arith.constant 0 : index
    %c0_65 = arith.constant 0 : index
    %59 = vector.load %arg2[%c2_62, %c0_63, %c0_64, %c0_65] : memref<3x3x32x32xbf16, #tpu.memory_space<vmem>>, vector<1x1x32x32xbf16>
    %60 = vector.shape_cast %59 : vector<1x1x32x32xbf16> to vector<32x32xbf16>
    %cst_66 = arith.constant dense<0.000000e+00> : vector<16x32xf32>
    %61 = tpu.matmul %51, %60, %cst_66 {dimension_numbers = #tpu.dot_dimension_numbers<[1], [0], [0], [1], [0, 0, 1, 1], [], []>} : vector<16x32xbf16>, vector<32x32xbf16>, vector<16x32xf32> -> vector<16x32xf32>
    %c2_67 = arith.constant 2 : index
    %c0_68 = arith.constant 0 : index
    %c0_69 = arith.constant 0 : index
    %c0_70 = arith.constant 0 : index
    %62 = vector.load %arg0[%c2_67, %c0_68, %c0_69, %c0_70] : memref<3x2x16x16xbf16, #tpu.memory_space<vmem>>, vector<1x1x16x16xbf16>
    %63 = vector.shape_cast %62 : vector<1x1x16x16xbf16> to vector<16x16xbf16>
    %64 = arith.truncf %61 : vector<16x32xf32> to vector<16x32xbf16>
    %cst_71 = arith.constant dense<0.000000e+00> : vector<16x32xf32>
    %65 = tpu.matmul %63, %64, %cst_71 {dimension_numbers = #tpu.dot_dimension_numbers<[1], [0], [0], [1], [0, 0, 1, 1], [], []>} : vector<16x16xbf16>, vector<16x32xbf16>, vector<16x32xf32> -> vector<16x32xf32>
    %66 = arith.addf %58, %65 : vector<16x32xf32>
    %c2_72 = arith.constant 2 : index
    %c1_73 = arith.constant 1 : index
    %c0_74 = arith.constant 0 : index
    %c0_75 = arith.constant 0 : index
    %67 = vector.load %arg2[%c2_72, %c1_73, %c0_74, %c0_75] : memref<3x3x32x32xbf16, #tpu.memory_space<vmem>>, vector<1x1x32x32xbf16>
    %68 = vector.shape_cast %67 : vector<1x1x32x32xbf16> to vector<32x32xbf16>
    %cst_76 = arith.constant dense<0.000000e+00> : vector<16x32xf32>
    %69 = tpu.matmul %51, %68, %cst_76 {dimension_numbers = #tpu.dot_dimension_numbers<[1], [0], [0], [1], [0, 0, 1, 1], [], []>} : vector<16x32xbf16>, vector<32x32xbf16>, vector<16x32xf32> -> vector<16x32xf32>
    %c2_77 = arith.constant 2 : index
    %c1_78 = arith.constant 1 : index
    %c0_79 = arith.constant 0 : index
    %c0_80 = arith.constant 0 : index
    %70 = vector.load %arg0[%c2_77, %c1_78, %c0_79, %c0_80] : memref<3x2x16x16xbf16, #tpu.memory_space<vmem>>, vector<1x1x16x16xbf16>
    %71 = vector.shape_cast %70 : vector<1x1x16x16xbf16> to vector<16x16xbf16>
    %72 = arith.truncf %69 : vector<16x32xf32> to vector<16x32xbf16>
    %cst_81 = arith.constant dense<0.000000e+00> : vector<16x32xf32>
    %73 = tpu.matmul %71, %72, %cst_81 {dimension_numbers = #tpu.dot_dimension_numbers<[1], [0], [0], [1], [0, 0, 1, 1], [], []>} : vector<16x16xbf16>, vector<16x32xbf16>, vector<16x32xf32> -> vector<16x32xf32>
    %74 = arith.addf %66, %73 : vector<16x32xf32>
    %75 = math.tanh %74 : vector<16x32xf32>
    %c0_82 = arith.constant 0 : index
    %c0_83 = arith.constant 0 : index
    %76 = vector.load %arg5[%c0_82, %c0_83] : memref<1x64xf32, #tpu.memory_space<vmem>>, vector<1x64xf32>
    %77 = arith.truncf %25 : vector<16x32xf32> to vector<16x32xbf16>
    %c0_84 = arith.constant 0 : index
    %c0_85 = arith.constant 0 : index
    %78 = vector.load %arg4[%c0_84, %c0_85] : memref<96x64xbf16, #tpu.memory_space<vmem>>, vector<32x64xbf16>
    %cst_86 = arith.constant dense<0.000000e+00> : vector<16x64xf32>
    %79 = tpu.matmul %77, %78, %cst_86 {dimension_numbers = #tpu.dot_dimension_numbers<[1], [0], [0], [1], [0, 0, 1, 1], [], []>} : vector<16x32xbf16>, vector<32x64xbf16>, vector<16x64xf32> -> vector<16x64xf32>
    %80 = vector.broadcast %76 : vector<1x64xf32> to vector<16x64xf32>
    %81 = arith.addf %80, %79 : vector<16x64xf32>
    %82 = arith.truncf %50 : vector<16x32xf32> to vector<16x32xbf16>
    %c32 = arith.constant 32 : index
    %c0_87 = arith.constant 0 : index
    %83 = vector.load %arg4[%c32, %c0_87] : memref<96x64xbf16, #tpu.memory_space<vmem>>, vector<32x64xbf16>
    %cst_88 = arith.constant dense<0.000000e+00> : vector<16x64xf32>
    %84 = tpu.matmul %82, %83, %cst_88 {dimension_numbers = #tpu.dot_dimension_numbers<[1], [0], [0], [1], [0, 0, 1, 1], [], []>} : vector<16x32xbf16>, vector<32x64xbf16>, vector<16x64xf32> -> vector<16x64xf32>
    %85 = arith.addf %81, %84 : vector<16x64xf32>
    %86 = arith.truncf %75 : vector<16x32xf32> to vector<16x32xbf16>
    %c64 = arith.constant 64 : index
    %c0_89 = arith.constant 0 : index
    %87 = vector.load %arg4[%c64, %c0_89] : memref<96x64xbf16, #tpu.memory_space<vmem>>, vector<32x64xbf16>
    %cst_90 = arith.constant dense<0.000000e+00> : vector<16x64xf32>
    %88 = tpu.matmul %86, %87, %cst_90 {dimension_numbers = #tpu.dot_dimension_numbers<[1], [0], [0], [1], [0, 0, 1, 1], [], []>} : vector<16x32xbf16>, vector<32x64xbf16>, vector<16x64xf32> -> vector<16x64xf32>
    %89 = arith.addf %85, %88 : vector<16x64xf32>
    %cst_91 = arith.constant 0.000000e+00 : f32
    %90 = vector.broadcast %cst_91 : f32 to vector<16x64xf32>
    %91 = arith.maximumf %89, %90 : vector<16x64xf32>
    %92 = arith.truncf %91 : vector<16x64xf32> to vector<16x64xbf16>
    %c0_92 = arith.constant 0 : index
    %c0_93 = arith.constant 0 : index
    %93 = vector.load %arg6[%c0_92, %c0_93] : memref<64x256xbf16, #tpu.memory_space<vmem>>, vector<64x256xbf16>
    %cst_94 = arith.constant dense<0.000000e+00> : vector<16x256xf32>
    %94 = tpu.matmul %92, %93, %cst_94 {dimension_numbers = #tpu.dot_dimension_numbers<[1], [0], [0], [1], [0, 0, 1, 1], [], []>} : vector<16x64xbf16>, vector<64x256xbf16>, vector<16x256xf32> -> vector<16x256xf32>
    %c0_95 = arith.constant 0 : index
    %c0_96 = arith.constant 0 : index
    %95 = vector.load %arg7[%c0_95, %c0_96] : memref<1x256xf32, #tpu.memory_space<vmem>>, vector<1x256xf32>
    %96 = vector.broadcast %95 : vector<1x256xf32> to vector<16x256xf32>
    %97 = arith.addf %94, %96 : vector<16x256xf32>
    %98 = vector.extract_strided_slice %97 {offsets = [0, 0], sizes = [16, 128], strides = [1, 1]} : vector<16x256xf32> to vector<16x128xf32>
    %99 = vector.extract_strided_slice %97 {offsets = [0, 128], sizes = [16, 128], strides = [1, 1]} : vector<16x256xf32> to vector<16x128xf32>
    %c0_97 = arith.constant 0 : index
    %c0_98 = arith.constant 0 : index
    %100 = vector.load %arg8[%c0_97, %c0_98] : memref<16x128xf32, #tpu.memory_space<vmem>>, vector<16x128xf32>
    %101 = math.exp %99 : vector<16x128xf32>
    %102 = arith.mulf %100, %101 : vector<16x128xf32>
    %103 = arith.addf %98, %102 : vector<16x128xf32>
    %c0_99 = arith.constant 0 : index
    %c0_100 = arith.constant 0 : index
    %104 = vector.load %arg9[%c0_99, %c0_100] : memref<16x128xf32, #tpu.memory_space<vmem>>, vector<16x128xf32>
    tpu.vector_store %arg9[%c0_99, %c0_100], %103 {strides = array<i32>} : memref<16x128xf32, #tpu.memory_space<vmem>>, vector<16x128xf32>,
    %105 = vector.extract_strided_slice %103 {offsets = [0, 0], sizes = [8, 128], strides = [1, 1]} : vector<16x128xf32> to vector<8x128xf32>
    %106 = vector.extract_strided_slice %103 {offsets = [8, 0], sizes = [8, 128], strides = [1, 1]} : vector<16x128xf32> to vector<8x128xf32>
    %107 = arith.mulf %105, %106 : vector<8x128xf32>
    %cst_101 = arith.constant 1.000000e+00 : f32
    %108 = vector.broadcast %cst_101 : f32 to vector<1x128xf32>
    %cst_102 = arith.constant dense<0.000000e+00> : vector<1x8xf32>
    %109 = tpu.matmul %108, %107, %cst_102 {dimension_numbers = #tpu.dot_dimension_numbers<[1], [1], [0], [0], [0, 0, 1, 0], [], []>} : vector<1x128xf32>, vector<8x128xf32>, vector<1x8xf32> -> vector<1x8xf32>
    %cst_103 = arith.constant 0.000000e+00 : f32
    %110 = vector.broadcast %cst_103 : f32 to vector<1x120xf32>
    %111 = tpu.concatenate %109, %110 in 1 : vector<1x8xf32>, vector<1x120xf32> -> vector<1x128xf32>
    %c0_104 = arith.constant 0 : index
    %c0_105 = arith.constant 0 : index
    %112 = vector.load %arg10[%c0_104, %c0_105] : memref<1x128xf32, #tpu.memory_space<vmem>>, vector<1x128xf32>
    tpu.vector_store %arg10[%c0_104, %c0_105], %111 {strides = array<i32>} : memref<1x128xf32, #tpu.memory_space<vmem>>, vector<1x128xf32>,
    return
  }
}

</mosaic_0001>

<llo_original>
// kernel: autoencoder_forward.1
$region0: #{autoencoder_forward.1}
  #allocation0 [shape = 'u32[]', space=smem, size = 0x4, offset = 0x4, fixed_abs, tag = 'smem constant byte address 0x4 - core index']
  #allocation1 [shape = 'u32[144,128]{1,0:T(1,128)}', space=vmem, size = 0x12000, scoped, tag = 'internal scratch']
  %s0 = inlined_call_operand.hbm [shape: bf16[3,2,16,16], index: 0, kind: input, shape index: {}]
  %s1 = inlined_call_operand.vmem [shape: f32[16,32], index: 1, kind: input, shape index: {}]
  %s2 = inlined_call_operand.hbm [shape: bf16[3,3,32,32], index: 2, kind: input, shape index: {}]
  %s3 = inlined_call_operand.hbm [shape: f32[3,1,32], index: 3, kind: input, shape index: {}]
  %s4 = inlined_call_operand.vmem [shape: bf16[96,64], index: 4, kind: input, shape index: {}]
  %s5 = inlined_call_operand.hbm [shape: f32[1,64], index: 5, kind: input, shape index: {}]
  %s6 = inlined_call_operand.vmem [shape: bf16[64,256], index: 6, kind: input, shape index: {}]
  %s7 = inlined_call_operand.vmem [shape: f32[1,256], index: 7, kind: input, shape index: {}]
  %s8 = inlined_call_operand.vmem [shape: f32[16,128], index: 8, kind: input, shape index: {}]
  %s9 = inlined_call_operand.hbm [shape: f32[16,128], index: 9, kind: output, shape index: {0}]
  %s10 = inlined_call_operand.vmem [shape: f32[1,128], index: 10, kind: output, shape index: {1}]
  %11 = xla_tuple %s9, %s10
  %s12 = sld [smem:[#allocation0]]
  $region70: #{autoencoder_forward.1} parent=0
    _
  %s14 = ssub.s32 1, %s12
  %s15 = scalar_select 0, %s14, %s12
  $region1: #{autoencoder_forward.1} parent=0
    #allocation2 [shape = 'u8[24576]{0}', space=vmem, size = 0x6000, scoped, tag = 'input window, operand 0, single buffered']
    #allocation3 [shape = 's32[1]{0}', space=sflag, size = 0x4, scoped, tag = 'scoped memory for autoencoder_forward.1']
    #allocation4 [shape = 's32[1]{0}', space=sflag, size = 0x4, scoped, tag = 'scoped memory for autoencoder_forward.1']
    #allocation5 [shape = 'u8[73728]{0}', space=vmem, size = 0x12000, scoped, tag = 'input window, operand 2, single buffered']
    #allocation6 [shape = 's32[1]{0}', space=sflag, size = 0x4, scoped, tag = 'scoped memory for autoencoder_forward.1']
    #allocation7 [shape = 'u8[1536]{0}', space=vmem, size = 0x800, scoped, tag = 'input window, operand 3, single buffered']
    #allocation8 [shape = 'u8[512]{0}', space=vmem, size = 0x400, scoped, tag = 'input window, operand 5, single buffered']
    #allocation9 [shape = 's32[1]{0}', space=sflag, size = 0x4, scoped, tag = 'scoped memory for autoencoder_forward.1']
    #allocation10 [shape = 'u8[8192]{0}', space=vmem, size = 0x2000, scoped, tag = 'output window, operand 0, single buffered']
    %16 = vsyncpa [#allocation3], 0
    %17 = vsyncpa [#allocation6], 0
    %18 = vsyncpa [#allocation9], 0
    %19 = vsyncpa [#allocation4], 0
    // Predicated region
    $region2: #{autoencoder_forward.1} parent=1 // pred_check
      _
    $region3: #{autoencoder_forward.1} parent=1 // pred_check_branch
      %21 = sbr.rel (0) target = $region5
    $region4: #{autoencoder_forward.1} parent=1 // pred_region
      %s23 = ssub.s32 768, 768
      %24 = vsyncadd [#allocation3], %s23
      %s25 = sshll.u32 [#allocation2], 4
      %s26 = int_to_ptr.vmem [resolvable:$true] %s25
      %31 = dma.hbm_to_vmem [thread:$0]  %s0, 768, %s26, [#allocation3], 64, 64, 4
    $region5: #{autoencoder_forward.1} parent=1 // pred_fallthru
      _
    // Predicated region
    $region6: #{autoencoder_forward.1} parent=1 // pred_check
      _
    $region7: #{autoencoder_forward.1} parent=1 // pred_check_branch
      %33 = sbr.rel (0) target = $region9
    $region8: #{autoencoder_forward.1} parent=1 // pred_region
      _
    $region9: #{autoencoder_forward.1} parent=1 // pred_fallthru
      _
    // Predicated region
    $region10: #{autoencoder_forward.1} parent=1 // pred_check
      _
    $region11: #{autoencoder_forward.1} parent=1 // pred_check_branch
      %35 = sbr.rel (0) target = $region13
    $region12: #{autoencoder_forward.1} parent=1 // pred_region
      %s37 = ssub.s32 2304, 2304
      %38 = vsyncadd [#allocation6], %s37
      %s39 = sshll.u32 [#allocation5], 4
      %s40 = int_to_ptr.vmem [resolvable:$true] %s39
      %45 = dma.hbm_to_vmem [thread:$0]  %s2, 2304, %s40, [#allocation6], 64, 64, 4
    $region13: #{autoencoder_forward.1} parent=1 // pred_fallthru
      _
    // Predicated region
    $region14: #{autoencoder_forward.1} parent=1 // pred_check
      _
    $region15: #{autoencoder_forward.1} parent=1 // pred_check_branch
      %47 = sbr.rel (0) target = $region17
    $region16: #{autoencoder_forward.1} parent=1 // pred_region
      %s49 = ssub.s32 48, 48
      %50 = vsyncadd [#allocation6], %s49
      %s51 = sshll.u32 [#allocation7], 4
      %s52 = int_to_ptr.vmem [resolvable:$true] %s51
      %57 = dma.hbm_to_vmem [thread:$0]  %s3, 48, %s52, [#allocation6], 16, 16, 1
    $region17: #{autoencoder_forward.1} parent=1 // pred_fallthru
      _
    // Predicated region
    $region18: #{autoencoder_forward.1} parent=1 // pred_check
      _
    $region19: #{autoencoder_forward.1} parent=1 // pred_check_branch
      %59 = sbr.rel (0) target = $region21
    $region20: #{autoencoder_forward.1} parent=1 // pred_region
      _
    $region21: #{autoencoder_forward.1} parent=1 // pred_fallthru
      _
    // Predicated region
    $region22: #{autoencoder_forward.1} parent=1 // pred_check
      _
    $region23: #{autoencoder_forward.1} parent=1 // pred_check_branch
      %61 = sbr.rel (0) target = $region25
    $region24: #{autoencoder_forward.1} parent=1 // pred_region
      %s63 = ssub.s32 16, 16
      %64 = vsyncadd [#allocation9], %s63
      %s66 = sshll.u32 [#allocation8], 4
      %s67 = int_to_ptr.vmem [resolvable:$true] %s66
      %69 = dma.hbm_to_vmem [thread:$0]  %s5, 16, %s67, [#allocation9]
    $region25: #{autoencoder_forward.1} parent=1 // pred_fallthru
      _
    // Predicated region
    $region26: #{autoencoder_forward.1} parent=1 // pred_check
      _
    $region27: #{autoencoder_forward.1} parent=1 // pred_check_branch
      %71 = sbr.rel (0) target = $region29
    $region28: #{autoencoder_forward.1} parent=1 // pred_region
      _
    $region29: #{autoencoder_forward.1} parent=1 // pred_fallthru
      _
    // Predicated region
    $region30: #{autoencoder_forward.1} parent=1 // pred_check
      _
    $region31: #{autoencoder_forward.1} parent=1 // pred_check_branch
      %73 = sbr.rel (0) target = $region33
    $region32: #{autoencoder_forward.1} parent=1 // pred_region
      _
    $region33: #{autoencoder_forward.1} parent=1 // pred_fallthru
      _
    // Predicated region
    $region34: #{autoencoder_forward.1} parent=1 // pred_check
      _
    $region35: #{autoencoder_forward.1} parent=1 // pred_check_branch
      %75 = sbr.rel (0) target = $region37
    $region36: #{autoencoder_forward.1} parent=1 // pred_region
      _
    $region37: #{autoencoder_forward.1} parent=1 // pred_fallthru
      _
    // Predicated region
    $region38: #{autoencoder_forward.1} parent=1 // pred_check
      _
    $region39: #{autoencoder_forward.1} parent=1 // pred_check_branch
      %77 = sbr.rel (0) target = $region41
    $region40: #{autoencoder_forward.1} parent=1 // pred_region
      %78 = dma.done [#allocation3], 768
    $region41: #{autoencoder_forward.1} parent=1 // pred_fallthru
      _
    // Predicated region
    $region42: #{autoencoder_forward.1} parent=1 // pred_check
      _
    $region43: #{autoencoder_forward.1} parent=1 // pred_check_branch
      %80 = sbr.rel (0) target = $region45
    $region44: #{autoencoder_forward.1} parent=1 // pred_region
      %81 = dma.done [#allocation6], 2304
    $region45: #{autoencoder_forward.1} parent=1 // pred_fallthru
      _
    // Predicated region
    $region46: #{autoencoder_forward.1} parent=1 // pred_check
      _
    $region47: #{autoencoder_forward.1} parent=1 // pred_check_branch
      %83 = sbr.rel (0) target = $region49
    $region48: #{autoencoder_forward.1} parent=1 // pred_region
      %84 = dma.done [#allocation6], 48
    $region49: #{autoencoder_forward.1} parent=1 // pred_fallthru
      _
    // Predicated region
    $region50: #{autoencoder_forward.1} parent=1 // pred_check
      _
    $region51: #{autoencoder_forward.1} parent=1 // pred_check_branch
      %86 = sbr.rel (0) target = $region53
    $region52: #{autoencoder_forward.1} parent=1 // pred_region
      %87 = dma.done [#allocation9], 16
    $region53: #{autoencoder_forward.1} parent=1 // pred_fallthru
      _
    %v89 = vld [vmem:[%s1] sm:$0xff]
    %v90 = vld [vmem:[%s1 + $0x8] sm:$0xff]
    %v91 = vpack.c.bf16 %v90, %v89
    %s92 = scalar_lea.vmem [#allocation5], 32
    %v93 = vld [vmem:[%s92] sm:$0xf]
    %v94 = vld [vmem:[%s92 + $0x4] sm:$0xf]
    %v95 = vld [vmem:[%s92 + $0x8] sm:$0xf]
    %v96 = vld [vmem:[%s92 + $0xc] sm:$0xf]
    %v97 = vld [vmem:[#allocation7] sm:$0x1]
    %v99 = vlaneseq
    %v100 = vshrl.u32 %v99, 7
    %v101 = vsub.s32 0, %v100
    %v102 = vrot.slane %v97, %v101
    %v108 = vunpack.c.l.b16 %v93
    %v109 = vunpack.c.l.b16 %v94
    %v110 = vunpack.c.l.b16 %v95
    %v111 = vunpack.c.l.b16 %v96
    %v112 = vpack.c.b16 %v109, %v108
    %v113 = vpack.c.b16 %v111, %v110
    %vm116 = vcmask 261120
    %v118 = vsel %vm116, %v91, 0
    %120 = vmatprep.subr.bf16.mxu0 0
    %121 = vmatpush1.bf16.msra.mxu0 %v112
    %122 = vmatprep.subr.bf16.mxu0 0
    %123 = vmatpush1.bf16.msra.mxu0 %v113
    %124 = vmatprep.subr.bf16.mxu0 0
    %125 = vmatpush1.bf16.msra.mxu0 0
    %126 = vmatprep.subr.bf16.mxu0 0
    %127 = vmatpush1.bf16.msra.mxu0 0
    %128 = vmatprep.subr.bf16.mxu0 0
    %129 = vmatpush1.bf16.msra.mxu0 0
    %130 = vmatprep.subr.bf16.mxu0 0
    %131 = vmatpush1.bf16.msra.mxu0 0
    %132 = vmatprep.subr.bf16.mxu0 0
    %133 = vmatpush1.bf16.msra.mxu0 0
    %134 = vmatprep.subr.bf16.mxu0 0
    %135 = vmatpush1.bf16.msra.mxu0 0
    %136 = vmatprep.subr.bf16.mxu0 0
    %137 = vmatpush1.bf16.msra.mxu0 0
    %138 = vmatprep.subr.bf16.mxu0 0
    %139 = vmatpush1.bf16.msra.mxu0 0
    %140 = vmatprep.subr.bf16.mxu0 0
    %141 = vmatpush1.bf16.msra.mxu0 0
    %142 = vmatprep.subr.bf16.mxu0 0
    %143 = vmatpush1.bf16.msra.mxu0 0
    %144 = vmatprep.subr.bf16.mxu0 0
    %145 = vmatpush1.bf16.msra.mxu0 0
    %146 = vmatprep.subr.bf16.mxu0 0
    %147 = vmatpush1.bf16.msra.mxu0 0
    %148 = vmatprep.subr.bf16.mxu0 0
    %149 = vmatpush1.bf16.msra.mxu0 0
    %150 = vmatprep.subr.bf16.mxu0 0
    %151 = vmatpush1.bf16.msra.mxu0 0
    %152 = vmatprep.mubr.bf16.mxu0 0
    %153 = vmatmul.mubr.bf16.gmra.mrb[0].mxu0 %v118
    %v154 = vpop.f32.mrb[0].mxu0
    %v155 = vadd.f32 %v102, %v154
    %v156 = vpop.f32.mrb[0].mxu0
    %v157 = vpop.f32.mrb[0].mxu0
    %v158 = vadd.f32 %v102, %v157
    %v159 = vpop.f32.mrb[0].mxu0
    %160 = vdwg.mxu0
    %v161 = vld [vmem:[#allocation5] sm:$0xf]
    %v162 = vld [vmem:[#allocation5 + $0x4] sm:$0xf]
    %v163 = vld [vmem:[#allocation5 + $0x8] sm:$0xf]
    %v164 = vld [vmem:[#allocation5 + $0xc] sm:$0xf]
    %v169 = vunpack.c.l.b16 %v161
    %v170 = vunpack.c.l.b16 %v162
    %v171 = vunpack.c.l.b16 %v163
    %v172 = vunpack.c.l.b16 %v164
    %v173 = vpack.c.b16 %v170, %v169
    %v174 = vpack.c.b16 %v172, %v171
    %177 = vmatprep.subr.bf16.mxu0 0
    %178 = vmatpush1.bf16.msra.mxu0 %v173
    %179 = vmatprep.subr.bf16.mxu0 0
    %180 = vmatpush1.bf16.msra.mxu0 %v174
    %181 = vmatprep.subr.bf16.mxu0 0
    %182 = vmatpush1.bf16.msra.mxu0 0
    %183 = vmatprep.subr.bf16.mxu0 0
    %184 = vmatpush1.bf16.msra.mxu0 0
    %185 = vmatprep.subr.bf16.mxu0 0
    %186 = vmatpush1.bf16.msra.mxu0 0
    %187 = vmatprep.subr.bf16.mxu0 0
    %188 = vmatpush1.bf16.msra.mxu0 0
    %189 = vmatprep.subr.bf16.mxu0 0
    %190 = vmatpush1.bf16.msra.mxu0 0
    %191 = vmatprep.subr.bf16.mxu0 0
    %192 = vmatpush1.bf16.msra.mxu0 0
    %193 = vmatprep.subr.bf16.mxu0 0
    %194 = vmatpush1.bf16.msra.mxu0 0
    %195 = vmatprep.subr.bf16.mxu0 0
    %196 = vmatpush1.bf16.msra.mxu0 0
    %197 = vmatprep.subr.bf16.mxu0 0
    %198 = vmatpush1.bf16.msra.mxu0 0
    %199 = vmatprep.subr.bf16.mxu0 0
    %200 = vmatpush1.bf16.msra.mxu0 0
    %201 = vmatprep.subr.bf16.mxu0 0
    %202 = vmatpush1.bf16.msra.mxu0 0
    %203 = vmatprep.subr.bf16.mxu0 0
    %204 = vmatpush1.bf16.msra.mxu0 0
    %205 = vmatprep.subr.bf16.mxu0 0
    %206 = vmatpush1.bf16.msra.mxu0 0
    %207 = vmatprep.subr.bf16.mxu0 0
    %208 = vmatpush1.bf16.msra.mxu0 0
    %209 = vmatprep.mubr.bf16.mxu0 0
    %210 = vmatmul.mubr.bf16.gmra.mrb[0].mxu0 %v118
    %v211 = vpop.f32.mrb[0].mxu0
    %v212 = vadd.f32 0.0, %v211
    %v213 = vpop.f32.mrb[0].mxu0
    %v214 = vpop.f32.mrb[0].mxu0
    %v215 = vadd.f32 0.0, %v214
    %v216 = vpop.f32.mrb[0].mxu0
    %217 = vdwg.mxu0
    %v218 = vld [vmem:[#allocation2] sm:$0xf]
    %v219 = vld [vmem:[#allocation2 + $0x4] sm:$0xf]
    %v220 = vpack.c.bf16 %v215, %v212
    %v223 = vunpack.c.l.b16 %v218
    %v224 = vunpack.c.l.b16 %v219
    %v225 = vpack.c.b16 %v224, %v223
    %vm226 = vcmask 130048
    %v228 = vsel %vm226, %v225, 0
    %230 = vmatprep.subr.bf16.mxu0 0
    %231 = vmatpush1.bf16.msra.mxu0 %v220
    %232 = vmatprep.subr.bf16.mxu0 0
    %233 = vmatpush1.bf16.msra.mxu0 0
    %234 = vmatprep.subr.bf16.mxu0 0
    %235 = vmatpush1.bf16.msra.mxu0 0
    %236 = vmatprep.subr.bf16.mxu0 0
    %237 = vmatpush1.bf16.msra.mxu0 0
    %238 = vmatprep.subr.bf16.mxu0 0
    %239 = vmatpush1.bf16.msra.mxu0 0
    %240 = vmatprep.subr.bf16.mxu0 0
    %241 = vmatpush1.bf16.msra.mxu0 0
    %242 = vmatprep.subr.bf16.mxu0 0
    %243 = vmatpush1.bf16.msra.mxu0 0
    %244 = vmatprep.subr.bf16.mxu0 0
    %245 = vmatpush1.bf16.msra.mxu0 0
    %246 = vmatprep.subr.bf16.mxu0 0
    %247 = vmatpush1.bf16.msra.mxu0 0
    %248 = vmatprep.subr.bf16.mxu0 0
    %249 = vmatpush1.bf16.msra.mxu0 0
    %250 = vmatprep.subr.bf16.mxu0 0
    %251 = vmatpush1.bf16.msra.mxu0 0
    %252 = vmatprep.subr.bf16.mxu0 0
    %253 = vmatpush1.bf16.msra.mxu0 0
    %254 = vmatprep.subr.bf16.mxu0 0
    %255 = vmatpush1.bf16.msra.mxu0 0
    %256 = vmatprep.subr.bf16.mxu0 0
    %257 = vmatpush1.bf16.msra.mxu0 0
    %258 = vmatprep.subr.bf16.mxu0 0
    %259 = vmatpush1.bf16.msra.mxu0 0
    %260 = vmatprep.subr.bf16.mxu0 0
    %261 = vmatpush1.bf16.msra.mxu0 0
    %262 = vmatprep.mubr.bf16.mxu0 0
    %263 = vmatmul.mubr.bf16.gmra.mrb[0].mxu0 %v228
    %v264 = vpop.f32.mrb[0].mxu0
    %v265 = vadd.f32 0.0, %v264
    %v266 = vpop.f32.mrb[0].mxu0
    %v267 = vpop.f32.mrb[0].mxu0
    %v268 = vadd.f32 0.0, %v267
    %v269 = vpop.f32.mrb[0].mxu0
    %270 = vdwg.mxu0
    %v271 = vadd.f32 %v155, %v265
    %v272 = vadd.f32 %v158, %v268
    %s273 = scalar_lea.vmem [#allocation5], 16
    %v274 = vld [vmem:[%s273] sm:$0xf]
    %v275 = vld [vmem:[%s273 + $0x4] sm:$0xf]
    %v276 = vld [vmem:[%s273 + $0x8] sm:$0xf]
    %v277 = vld [vmem:[%s273 + $0xc] sm:$0xf]
    %v282 = vunpack.c.l.b16 %v274
    %v283 = vunpack.c.l.b16 %v275
    %v284 = vunpack.c.l.b16 %v276
    %v285 = vunpack.c.l.b16 %v277
    %v286 = vpack.c.b16 %v283, %v282
    %v287 = vpack.c.b16 %v285, %v284
    %290 = vmatprep.subr.bf16.mxu0 0
    %291 = vmatpush1.bf16.msra.mxu0 %v286
    %292 = vmatprep.subr.bf16.mxu0 0
    %293 = vmatpush1.bf16.msra.mxu0 %v287
    %294 = vmatprep.subr.bf16.mxu0 0
    %295 = vmatpush1.bf16.msra.mxu0 0
    %296 = vmatprep.subr.bf16.mxu0 0
    %297 = vmatpush1.bf16.msra.mxu0 0
    %298 = vmatprep.subr.bf16.mxu0 0
    %299 = vmatpush1.bf16.msra.mxu0 0
    %300 = vmatprep.subr.bf16.mxu0 0
    %301 = vmatpush1.bf16.msra.mxu0 0
    %302 = vmatprep.subr.bf16.mxu0 0
    %303 = vmatpush1.bf16.msra.mxu0 0
    %304 = vmatprep.subr.bf16.mxu0 0
    %305 = vmatpush1.bf16.msra.mxu0 0
    %306 = vmatprep.subr.bf16.mxu0 0
    %307 = vmatpush1.bf16.msra.mxu0 0
    %308 = vmatprep.subr.bf16.mxu0 0
    %309 = vmatpush1.bf16.msra.mxu0 0
    %310 = vmatprep.subr.bf16.mxu0 0
    %311 = vmatpush1.bf16.msra.mxu0 0
    %312 = vmatprep.subr.bf16.mxu0 0
    %313 = vmatpush1.bf16.msra.mxu0 0
    %314 = vmatprep.subr.bf16.mxu0 0
    %315 = vmatpush1.bf16.msra.mxu0 0
    %316 = vmatprep.subr.bf16.mxu0 0
    %317 = vmatpush1.bf16.msra.mxu0 0
    %318 = vmatprep.subr.bf16.mxu0 0
    %319 = vmatpush1.bf16.msra.mxu0 0
    %320 = vmatprep.subr.bf16.mxu0 0
    %321 = vmatpush1.bf16.msra.mxu0 0
    %322 = vmatprep.mubr.bf16.mxu0 0
    %323 = vmatmul.mubr.bf16.gmra.mrb[0].mxu0 %v118
    %v324 = vpop.f32.mrb[0].mxu0
    %v325 = vadd.f32 0.0, %v324
    %v326 = vpop.f32.mrb[0].mxu0
    %v327 = vpop.f32.mrb[0].mxu0
    %v328 = vadd.f32 0.0, %v327
    %v329 = vpop.f32.mrb[0].mxu0
    %330 = vdwg.mxu0
    %s331 = scalar_lea.vmem [#allocation2], 8
    %v332 = vld [vmem:[%s331] sm:$0xf]
    %v333 = vld [vmem:[%s331 + $0x4] sm:$0xf]
    %v334 = vpack.c.bf16 %v328, %v325
    %v337 = vunpack.c.l.b16 %v332
    %v338 = vunpack.c.l.b16 %v333
    %v339 = vpack.c.b16 %v338, %v337
    %v341 = vsel %vm226, %v339, 0
    %343 = vmatprep.subr.bf16.mxu0 0
    %344 = vmatpush1.bf16.msra.mxu0 %v334
    %345 = vmatprep.subr.bf16.mxu0 0
    %346 = vmatpush1.bf16.msra.mxu0 0
    %347 = vmatprep.subr.bf16.mxu0 0
    %348 = vmatpush1.bf16.msra.mxu0 0
    %349 = vmatprep.subr.bf16.mxu0 0
    %350 = vmatpush1.bf16.msra.mxu0 0
    %351 = vmatprep.subr.bf16.mxu0 0
    %352 = vmatpush1.bf16.msra.mxu0 0
    %353 = vmatprep.subr.bf16.mxu0 0
    %354 = vmatpush1.bf16.msra.mxu0 0
    %355 = vmatprep.subr.bf16.mxu0 0
    %356 = vmatpush1.bf16.msra.mxu0 0
    %357 = vmatprep.subr.bf16.mxu0 0
    %358 = vmatpush1.bf16.msra.mxu0 0
    %359 = vmatprep.subr.bf16.mxu0 0
    %360 = vmatpush1.bf16.msra.mxu0 0
    %361 = vmatprep.subr.bf16.mxu0 0
    %362 = vmatpush1.bf16.msra.mxu0 0
    %363 = vmatprep.subr.bf16.mxu0 0
    %364 = vmatpush1.bf16.msra.mxu0 0
    %365 = vmatprep.subr.bf16.mxu0 0
    %366 = vmatpush1.bf16.msra.mxu0 0
    %367 = vmatprep.subr.bf16.mxu0 0
    %368 = vmatpush1.bf16.msra.mxu0 0
    %369 = vmatprep.subr.bf16.mxu0 0
    %370 = vmatpush1.bf16.msra.mxu0 0
    %371 = vmatprep.subr.bf16.mxu0 0
    %372 = vmatpush1.bf16.msra.mxu0 0
    %373 = vmatprep.subr.bf16.mxu0 0
    %374 = vmatpush1.bf16.msra.mxu0 0
    %375 = vmatprep.mubr.bf16.mxu0 0
    %376 = vmatmul.mubr.bf16.gmra.mrb[0].mxu0 %v341
    %v377 = vpop.f32.mrb[0].mxu0
    %v378 = vadd.f32 0.0, %v377
    %v379 = vpop.f32.mrb[0].mxu0
    %v380 = vpop.f32.mrb[0].mxu0
    %v381 = vadd.f32 0.0, %v380
    %v382 = vpop.f32.mrb[0].mxu0
    %383 = vdwg.mxu0
    %v384 = vadd.f32 %v271, %v378
    %v385 = vadd.f32 %v272, %v381
    %v386 = vtanh.pop %v384
    %v387 = vtanh.pop %v385
    %v388 = vpack.c.bf16 %v387, %v386
    %s389 = scalar_lea.vmem [#allocation5], 80
    %v390 = vld [vmem:[%s389] sm:$0xf]
    %v391 = vld [vmem:[%s389 + $0x4] sm:$0xf]
    %v392 = vld [vmem:[%s389 + $0x8] sm:$0xf]
    %v393 = vld [vmem:[%s389 + $0xc] sm:$0xf]
    %s394 = scalar_lea.vmem [#allocation7], 1
    %v395 = vld [vmem:[%s394] sm:$0x1]
    %v397 = vlaneseq
    %v398 = vshrl.u32 %v397, 7
    %v399 = vsub.s32 0, %v398
    %v400 = vrot.slane %v395, %v399
    %v406 = vunpack.c.l.b16 %v390
    %v407 = vunpack.c.l.b16 %v391
    %v408 = vunpack.c.l.b16 %v392
    %v409 = vunpack.c.l.b16 %v393
    %v410 = vpack.c.b16 %v407, %v406
    %v411 = vpack.c.b16 %v409, %v408
    %v415 = vsel %vm116, %v388, 0
    %417 = vmatprep.subr.bf16.mxu0 0
    %418 = vmatpush1.bf16.msra.mxu0 %v410
    %419 = vmatprep.subr.bf16.mxu0 0
    %420 = vmatpush1.bf16.msra.mxu0 %v411
    %421 = vmatprep.subr.bf16.mxu0 0
    %422 = vmatpush1.bf16.msra.mxu0 0
    %423 = vmatprep.subr.bf16.mxu0 0
    %424 = vmatpush1.bf16.msra.mxu0 0
    %425 = vmatprep.subr.bf16.mxu0 0
    %426 = vmatpush1.bf16.msra.mxu0 0
    %427 = vmatprep.subr.bf16.mxu0 0
    %428 = vmatpush1.bf16.msra.mxu0 0
    %429 = vmatprep.subr.bf16.mxu0 0
    %430 = vmatpush1.bf16.msra.mxu0 0
    %431 = vmatprep.subr.bf16.mxu0 0
    %432 = vmatpush1.bf16.msra.mxu0 0
    %433 = vmatprep.subr.bf16.mxu0 0
    %434 = vmatpush1.bf16.msra.mxu0 0
    %435 = vmatprep.subr.bf16.mxu0 0
    %436 = vmatpush1.bf16.msra.mxu0 0
    %437 = vmatprep.subr.bf16.mxu0 0
    %438 = vmatpush1.bf16.msra.mxu0 0
    %439 = vmatprep.subr.bf16.mxu0 0
    %440 = vmatpush1.bf16.msra.mxu0 0
    %441 = vmatprep.subr.bf16.mxu0 0
    %442 = vmatpush1.bf16.msra.mxu0 0
    %443 = vmatprep.subr.bf16.mxu0 0
    %444 = vmatpush1.bf16.msra.mxu0 0
    %445 = vmatprep.subr.bf16.mxu0 0
    %446 = vmatpush1.bf16.msra.mxu0 0
    %447 = vmatprep.subr.bf16.mxu0 0
    %448 = vmatpush1.bf16.msra.mxu0 0
    %449 = vmatprep.mubr.bf16.mxu0 0
    %450 = vmatmul.mubr.bf16.gmra.mrb[0].mxu0 %v415
    %v451 = vpop.f32.mrb[0].mxu0
    %v452 = vadd.f32 %v400, %v451
    %v453 = vpop.f32.mrb[0].mxu0
    %v454 = vpop.f32.mrb[0].mxu0
    %v455 = vadd.f32 %v400, %v454
    %v456 = vpop.f32.mrb[0].mxu0
    %457 = vdwg.mxu0
    %s458 = scalar_lea.vmem [#allocation5], 48
    %v459 = vld [vmem:[%s458] sm:$0xf]
    %v460 = vld [vmem:[%s458 + $0x4] sm:$0xf]
    %v461 = vld [vmem:[%s458 + $0x8] sm:$0xf]
    %v462 = vld [vmem:[%s458 + $0xc] sm:$0xf]
    %v467 = vunpack.c.l.b16 %v459
    %v468 = vunpack.c.l.b16 %v460
    %v469 = vunpack.c.l.b16 %v461
    %v470 = vunpack.c.l.b16 %v462
    %v471 = vpack.c.b16 %v468, %v467
    %v472 = vpack.c.b16 %v470, %v469
    %475 = vmatprep.subr.bf16.mxu0 0
    %476 = vmatpush1.bf16.msra.mxu0 %v471
    %477 = vmatprep.subr.bf16.mxu0 0
    %478 = vmatpush1.bf16.msra.mxu0 %v472
    %479 = vmatprep.subr.bf16.mxu0 0
    %480 = vmatpush1.bf16.msra.mxu0 0
    %481 = vmatprep.subr.bf16.mxu0 0
    %482 = vmatpush1.bf16.msra.mxu0 0
    %483 = vmatprep.subr.bf16.mxu0 0
    %484 = vmatpush1.bf16.msra.mxu0 0
    %485 = vmatprep.subr.bf16.mxu0 0
    %486 = vmatpush1.bf16.msra.mxu0 0
    %487 = vmatprep.subr.bf16.mxu0 0
    %488 = vmatpush1.bf16.msra.mxu0 0
    %489 = vmatprep.subr.bf16.mxu0 0
    %490 = vmatpush1.bf16.msra.mxu0 0
    %491 = vmatprep.subr.bf16.mxu0 0
    %492 = vmatpush1.bf16.msra.mxu0 0
    %493 = vmatprep.subr.bf16.mxu0 0
    %494 = vmatpush1.bf16.msra.mxu0 0
    %495 = vmatprep.subr.bf16.mxu0 0
    %496 = vmatpush1.bf16.msra.mxu0 0
    %497 = vmatprep.subr.bf16.mxu0 0
    %498 = vmatpush1.bf16.msra.mxu0 0
    %499 = vmatprep.subr.bf16.mxu0 0
    %500 = vmatpush1.bf16.msra.mxu0 0
    %501 = vmatprep.subr.bf16.mxu0 0
    %502 = vmatpush1.bf16.msra.mxu0 0
    %503 = vmatprep.subr.bf16.mxu0 0
    %504 = vmatpush1.bf16.msra.mxu0 0
    %505 = vmatprep.subr.bf16.mxu0 0
    %506 = vmatpush1.bf16.msra.mxu0 0
    %507 = vmatprep.mubr.bf16.mxu0 0
    %508 = vmatmul.mubr.bf16.gmra.mrb[0].mxu0 %v415
    %v509 = vpop.f32.mrb[0].mxu0
    %v510 = vadd.f32 0.0, %v509
    %v511 = vpop.f32.mrb[0].mxu0
    %v512 = vpop.f32.mrb[0].mxu0
    %v513 = vadd.f32 0.0, %v512
    %v514 = vpop.f32.mrb[0].mxu0
    %515 = vdwg.mxu0
    %s516 = scalar_lea.vmem [#allocation2], 16
    %v517 = vld [vmem:[%s516] sm:$0xf]
    %v518 = vld [vmem:[%s516 + $0x4] sm:$0xf]
    %v519 = vpack.c.bf16 %v513, %v510
    %v522 = vunpack.c.l.b16 %v517
    %v523 = vunpack.c.l.b16 %v518
    %v524 = vpack.c.b16 %v523, %v522
    %v526 = vsel %vm226, %v524, 0
    %528 = vmatprep.subr.bf16.mxu0 0
    %529 = vmatpush1.bf16.msra.mxu0 %v519
    %530 = vmatprep.subr.bf16.mxu0 0
    %531 = vmatpush1.bf16.msra.mxu0 0
    %532 = vmatprep.subr.bf16.mxu0 0
    %533 = vmatpush1.bf16.msra.mxu0 0
    %534 = vmatprep.subr.bf16.mxu0 0
    %535 = vmatpush1.bf16.msra.mxu0 0
    %536 = vmatprep.subr.bf16.mxu0 0
    %537 = vmatpush1.bf16.msra.mxu0 0
    %538 = vmatprep.subr.bf16.mxu0 0
    %539 = vmatpush1.bf16.msra.mxu0 0
    %540 = vmatprep.subr.bf16.mxu0 0
    %541 = vmatpush1.bf16.msra.mxu0 0
    %542 = vmatprep.subr.bf16.mxu0 0
    %543 = vmatpush1.bf16.msra.mxu0 0
    %544 = vmatprep.subr.bf16.mxu0 0
    %545 = vmatpush1.bf16.msra.mxu0 0
    %546 = vmatprep.subr.bf16.mxu0 0
    %547 = vmatpush1.bf16.msra.mxu0 0
    %548 = vmatprep.subr.bf16.mxu0 0
    %549 = vmatpush1.bf16.msra.mxu0 0
    %550 = vmatprep.subr.bf16.mxu0 0
    %551 = vmatpush1.bf16.msra.mxu0 0
    %552 = vmatprep.subr.bf16.mxu0 0
    %553 = vmatpush1.bf16.msra.mxu0 0
    %554 = vmatprep.subr.bf16.mxu0 0
    %555 = vmatpush1.bf16.msra.mxu0 0
    %556 = vmatprep.subr.bf16.mxu0 0
    %557 = vmatpush1.bf16.msra.mxu0 0
    %558 = vmatprep.subr.bf16.mxu0 0
    %559 = vmatpush1.bf16.msra.mxu0 0
    %560 = vmatprep.mubr.bf16.mxu0 0
    %561 = vmatmul.mubr.bf16.gmra.mrb[0].mxu0 %v526
    %v562 = vpop.f32.mrb[0].mxu0
    %v563 = vadd.f32 0.0, %v562
    %v564 = vpop.f32.mrb[0].mxu0
    %v565 = vpop.f32.mrb[0].mxu0
    %v566 = vadd.f32 0.0, %v565
    %v567 = vpop.f32.mrb[0].mxu0
    %568 = vdwg.mxu0
    %v569 = vadd.f32 %v452, %v563
    %v570 = vadd.f32 %v455, %v566
    %s571 = scalar_lea.vmem [#allocation5], 64
    %v572 = vld [vmem:[%s571] sm:$0xf]
    %v573 = vld [vmem:[%s571 + $0x4] sm:$0xf]
    %v574 = vld [vmem:[%s571 + $0x8] sm:$0xf]
    %v575 = vld [vmem:[%s571 + $0xc] sm:$0xf]
    %v580 = vunpack.c.l.b16 %v572
    %v581 = vunpack.c.l.b16 %v573
    %v582 = vunpack.c.l.b16 %v574
    %v583 = vunpack.c.l.b16 %v575
    %v584 = vpack.c.b16 %v581, %v580
    %v585 = vpack.c.b16 %v583, %v582
    %588 = vmatprep.subr.bf16.mxu0 0
    %589 = vmatpush1.bf16.msra.mxu0 %v584
    %590 = vmatprep.subr.bf16.mxu0 0
    %591 = vmatpush1.bf16.msra.mxu0 %v585
    %592 = vmatprep.subr.bf16.mxu0 0
    %593 = vmatpush1.bf16.msra.mxu0 0
    %594 = vmatprep.subr.bf16.mxu0 0
    %595 = vmatpush1.bf16.msra.mxu0 0
    %596 = vmatprep.subr.bf16.mxu0 0
    %597 = vmatpush1.bf16.msra.mxu0 0
    %598 = vmatprep.subr.bf16.mxu0 0
    %599 = vmatpush1.bf16.msra.mxu0 0
    %600 = vmatprep.subr.bf16.mxu0 0
    %601 = vmatpush1.bf16.msra.mxu0 0
    %602 = vmatprep.subr.bf16.mxu0 0
    %603 = vmatpush1.bf16.msra.mxu0 0
    %604 = vmatprep.subr.bf16.mxu0 0
    %605 = vmatpush1.bf16.msra.mxu0 0
    %606 = vmatprep.subr.bf16.mxu0 0
    %607 = vmatpush1.bf16.msra.mxu0 0
    %608 = vmatprep.subr.bf16.mxu0 0
    %609 = vmatpush1.bf16.msra.mxu0 0
    %610 = vmatprep.subr.bf16.mxu0 0
    %611 = vmatpush1.bf16.msra.mxu0 0
    %612 = vmatprep.subr.bf16.mxu0 0
    %613 = vmatpush1.bf16.msra.mxu0 0
    %614 = vmatprep.subr.bf16.mxu0 0
    %615 = vmatpush1.bf16.msra.mxu0 0
    %616 = vmatprep.subr.bf16.mxu0 0
    %617 = vmatpush1.bf16.msra.mxu0 0
    %618 = vmatprep.subr.bf16.mxu0 0
    %619 = vmatpush1.bf16.msra.mxu0 0
    %620 = vmatprep.mubr.bf16.mxu0 0
    %621 = vmatmul.mubr.bf16.gmra.mrb[0].mxu0 %v415
    %v622 = vpop.f32.mrb[0].mxu0
    %v623 = vadd.f32 0.0, %v622
    %v624 = vpop.f32.mrb[0].mxu0
    %v625 = vpop.f32.mrb[0].mxu0
    %v626 = vadd.f32 0.0, %v625
    %v627 = vpop.f32.mrb[0].mxu0
    %628 = vdwg.mxu0
    %s629 = scalar_lea.vmem [#allocation2], 24
    %v630 = vld [vmem:[%s629] sm:$0xf]
    %v631 = vld [vmem:[%s629 + $0x4] sm:$0xf]
    %v632 = vpack.c.bf16 %v626, %v623
    %v635 = vunpack.c.l.b16 %v630
    %v636 = vunpack.c.l.b16 %v631
    %v637 = vpack.c.b16 %v636, %v635
    %v639 = vsel %vm226, %v637, 0
    %641 = vmatprep.subr.bf16.mxu0 0
    %642 = vmatpush1.bf16.msra.mxu0 %v632
    %643 = vmatprep.subr.bf16.mxu0 0
    %644 = vmatpush1.bf16.msra.mxu0 0
    %645 = vmatprep.subr.bf16.mxu0 0
    %646 = vmatpush1.bf16.msra.mxu0 0
    %647 = vmatprep.subr.bf16.mxu0 0
    %648 = vmatpush1.bf16.msra.mxu0 0
    %649 = vmatprep.subr.bf16.mxu0 0
    %650 = vmatpush1.bf16.msra.mxu0 0
    %651 = vmatprep.subr.bf16.mxu0 0
    %652 = vmatpush1.bf16.msra.mxu0 0
    %653 = vmatprep.subr.bf16.mxu0 0
    %654 = vmatpush1.bf16.msra.mxu0 0
    %655 = vmatprep.subr.bf16.mxu0 0
    %656 = vmatpush1.bf16.msra.mxu0 0
    %657 = vmatprep.subr.bf16.mxu0 0
    %658 = vmatpush1.bf16.msra.mxu0 0
    %659 = vmatprep.subr.bf16.mxu0 0
    %660 = vmatpush1.bf16.msra.mxu0 0
    %661 = vmatprep.subr.bf16.mxu0 0
    %662 = vmatpush1.bf16.msra.mxu0 0
    %663 = vmatprep.subr.bf16.mxu0 0
    %664 = vmatpush1.bf16.msra.mxu0 0
    %665 = vmatprep.subr.bf16.mxu0 0
    %666 = vmatpush1.bf16.msra.mxu0 0
    %667 = vmatprep.subr.bf16.mxu0 0
    %668 = vmatpush1.bf16.msra.mxu0 0
    %669 = vmatprep.subr.bf16.mxu0 0
    %670 = vmatpush1.bf16.msra.mxu0 0
    %671 = vmatprep.subr.bf16.mxu0 0
    %672 = vmatpush1.bf16.msra.mxu0 0
    %673 = vmatprep.mubr.bf16.mxu0 0
    %674 = vmatmul.mubr.bf16.gmra.mrb[0].mxu0 %v639
    %v675 = vpop.f32.mrb[0].mxu0
    %v676 = vadd.f32 0.0, %v675
    %v677 = vpop.f32.mrb[0].mxu0
    %v678 = vpop.f32.mrb[0].mxu0
    %v679 = vadd.f32 0.0, %v678
    %v680 = vpop.f32.mrb[0].mxu0
    %681 = vdwg.mxu0
    %v682 = vadd.f32 %v569, %v676
    %v683 = vadd.f32 %v570, %v679
    %v684 = vtanh.pop %v682
    %v685 = vtanh.pop %v683
    %v686 = vpack.c.bf16 %v685, %v684
    %s687 = scalar_lea.vmem [#allocation5], 128
    %v688 = vld [vmem:[%s687] sm:$0xf]
    %v689 = vld [vmem:[%s687 + $0x4] sm:$0xf]
    %v690 = vld [vmem:[%s687 + $0x8] sm:$0xf]
    %v691 = vld [vmem:[%s687 + $0xc] sm:$0xf]
    %s692 = scalar_lea.vmem [#allocation7], 2
    %v693 = vld [vmem:[%s692] sm:$0x1]
    %v695 = vlaneseq
    %v696 = vshrl.u32 %v695, 7
    %v697 = vsub.s32 0, %v696
    %v698 = vrot.slane %v693, %v697
    %v704 = vunpack.c.l.b16 %v688
    %v705 = vunpack.c.l.b16 %v689
    %v706 = vunpack.c.l.b16 %v690
    %v707 = vunpack.c.l.b16 %v691
    %v708 = vpack.c.b16 %v705, %v704
    %v709 = vpack.c.b16 %v707, %v706
    %v713 = vsel %vm116, %v686, 0
    %715 = vmatprep.subr.bf16.mxu0 0
    %716 = vmatpush1.bf16.msra.mxu0 %v708
    %717 = vmatprep.subr.bf16.mxu0 0
    %718 = vmatpush1.bf16.msra.mxu0 %v709
    %719 = vmatprep.subr.bf16.mxu0 0
    %720 = vmatpush1.bf16.msra.mxu0 0
    %721 = vmatprep.subr.bf16.mxu0 0
    %722 = vmatpush1.bf16.msra.mxu0 0
    %723 = vmatprep.subr.bf16.mxu0 0
    %724 = vmatpush1.bf16.msra.mxu0 0
    %725 = vmatprep.subr.bf16.mxu0 0
    %726 = vmatpush1.bf16.msra.mxu0 0
    %727 = vmatprep.subr.bf16.mxu0 0
    %728 = vmatpush1.bf16.msra.mxu0 0
    %729 = vmatprep.subr.bf16.mxu0 0
    %730 = vmatpush1.bf16.msra.mxu0 0
    %731 = vmatprep.subr.bf16.mxu0 0
    %732 = vmatpush1.bf16.msra.mxu0 0
    %733 = vmatprep.subr.bf16.mxu0 0
    %734 = vmatpush1.bf16.msra.mxu0 0
    %735 = vmatprep.subr.bf16.mxu0 0
    %736 = vmatpush1.bf16.msra.mxu0 0
    %737 = vmatprep.subr.bf16.mxu0 0
    %738 = vmatpush1.bf16.msra.mxu0 0
    %739 = vmatprep.subr.bf16.mxu0 0
    %740 = vmatpush1.bf16.msra.mxu0 0
    %741 = vmatprep.subr.bf16.mxu0 0
    %742 = vmatpush1.bf16.msra.mxu0 0
    %743 = vmatprep.subr.bf16.mxu0 0
    %744 = vmatpush1.bf16.msra.mxu0 0
    %745 = vmatprep.subr.bf16.mxu0 0
    %746 = vmatpush1.bf16.msra.mxu0 0
    %747 = vmatprep.mubr.bf16.mxu0 0
    %748 = vmatmul.mubr.bf16.gmra.mrb[0].mxu0 %v713
    %v749 = vpop.f32.mrb[0].mxu0
    %v750 = vadd.f32 %v698, %v749
    %v751 = vpop.f32.mrb[0].mxu0
    %v752 = vpop.f32.mrb[0].mxu0
    %v753 = vadd.f32 %v698, %v752
    %v754 = vpop.f32.mrb[0].mxu0
    %755 = vdwg.mxu0
    %s756 = scalar_lea.vmem [#allocation5], 96
    %v757 = vld [vmem:[%s756] sm:$0xf]
    %v758 = vld [vmem:[%s756 + $0x4] sm:$0xf]
    %v759 = vld [vmem:[%s756 + $0x8] sm:$0xf]
    %v760 = vld [vmem:[%s756 + $0xc] sm:$0xf]
    %v765 = vunpack.c.l.b16 %v757
    %v766 = vunpack.c.l.b16 %v758
    %v767 = vunpack.c.l.b16 %v759
    %v768 = vunpack.c.l.b16 %v760
    %v769 = vpack.c.b16 %v766, %v765
    %v770 = vpack.c.b16 %v768, %v767
    %773 = vmatprep.subr.bf16.mxu0 0
    %774 = vmatpush1.bf16.msra.mxu0 %v769
    %775 = vmatprep.subr.bf16.mxu0 0
    %776 = vmatpush1.bf16.msra.mxu0 %v770
    %777 = vmatprep.subr.bf16.mxu0 0
    %778 = vmatpush1.bf16.msra.mxu0 0
    %779 = vmatprep.subr.bf16.mxu0 0
    %780 = vmatpush1.bf16.msra.mxu0 0
    %781 = vmatprep.subr.bf16.mxu0 0
    %782 = vmatpush1.bf16.msra.mxu0 0
    %783 = vmatprep.subr.bf16.mxu0 0
    %784 = vmatpush1.bf16.msra.mxu0 0
    %785 = vmatprep.subr.bf16.mxu0 0
    %786 = vmatpush1.bf16.msra.mxu0 0
    %787 = vmatprep.subr.bf16.mxu0 0
    %788 = vmatpush1.bf16.msra.mxu0 0
    %789 = vmatprep.subr.bf16.mxu0 0
    %790 = vmatpush1.bf16.msra.mxu0 0
    %791 = vmatprep.subr.bf16.mxu0 0
    %792 = vmatpush1.bf16.msra.mxu0 0
    %793 = vmatprep.subr.bf16.mxu0 0
    %794 = vmatpush1.bf16.msra.mxu0 0
    %795 = vmatprep.subr.bf16.mxu0 0
    %796 = vmatpush1.bf16.msra.mxu0 0
    %797 = vmatprep.subr.bf16.mxu0 0
    %798 = vmatpush1.bf16.msra.mxu0 0
    %799 = vmatprep.subr.bf16.mxu0 0
    %800 = vmatpush1.bf16.msra.mxu0 0
    %801 = vmatprep.subr.bf16.mxu0 0
    %802 = vmatpush1.bf16.msra.mxu0 0
    %803 = vmatprep.subr.bf16.mxu0 0
    %804 = vmatpush1.bf16.msra.mxu0 0
    %805 = vmatprep.mubr.bf16.mxu0 0
    %806 = vmatmul.mubr.bf16.gmra.mrb[0].mxu0 %v713
    %v807 = vpop.f32.mrb[0].mxu0
    %v808 = vadd.f32 0.0, %v807
    %v809 = vpop.f32.mrb[0].mxu0
    %v810 = vpop.f32.mrb[0].mxu0
    %v811 = vadd.f32 0.0, %v810
    %v812 = vpop.f32.mrb[0].mxu0
    %813 = vdwg.mxu0
    %s814 = scalar_lea.vmem [#allocation2], 32
    %v815 = vld [vmem:[%s814] sm:$0xf]
    %v816 = vld [vmem:[%s814 + $0x4] sm:$0xf]
    %v817 = vpack.c.bf16 %v811, %v808
    %v820 = vunpack.c.l.b16 %v815
    %v821 = vunpack.c.l.b16 %v816
    %v822 = vpack.c.b16 %v821, %v820
    %v824 = vsel %vm226, %v822, 0
    %826 = vmatprep.subr.bf16.mxu0 0
    %827 = vmatpush1.bf16.msra.mxu0 %v817
    %828 = vmatprep.subr.bf16.mxu0 0
    %829 = vmatpush1.bf16.msra.mxu0 0
    %830 = vmatprep.subr.bf16.mxu0 0
    %831 = vmatpush1.bf16.msra.mxu0 0
    %832 = vmatprep.subr.bf16.mxu0 0
    %833 = vmatpush1.bf16.msra.mxu0 0
    %834 = vmatprep.subr.bf16.mxu0 0
    %835 = vmatpush1.bf16.msra.mxu0 0
    %836 = vmatprep.subr.bf16.mxu0 0
    %837 = vmatpush1.bf16.msra.mxu0 0
    %838 = vmatprep.subr.bf16.mxu0 0
    %839 = vmatpush1.bf16.msra.mxu0 0
    %840 = vmatprep.subr.bf16.mxu0 0
    %841 = vmatpush1.bf16.msra.mxu0 0
    %842 = vmatprep.subr.bf16.mxu0 0
    %843 = vmatpush1.bf16.msra.mxu0 0
    %844 = vmatprep.subr.bf16.mxu0 0
    %845 = vmatpush1.bf16.msra.mxu0 0
    %846 = vmatprep.subr.bf16.mxu0 0
    %847 = vmatpush1.bf16.msra.mxu0 0
    %848 = vmatprep.subr.bf16.mxu0 0
    %849 = vmatpush1.bf16.msra.mxu0 0
    %850 = vmatprep.subr.bf16.mxu0 0
    %851 = vmatpush1.bf16.msra.mxu0 0
    %852 = vmatprep.subr.bf16.mxu0 0
    %853 = vmatpush1.bf16.msra.mxu0 0
    %854 = vmatprep.subr.bf16.mxu0 0
    %855 = vmatpush1.bf16.msra.mxu0 0
    %856 = vmatprep.subr.bf16.mxu0 0
    %857 = vmatpush1.bf16.msra.mxu0 0
    %858 = vmatprep.mubr.bf16.mxu0 0
    %859 = vmatmul.mubr.bf16.gmra.mrb[0].mxu0 %v824
    %v860 = vpop.f32.mrb[0].mxu0
    %v861 = vadd.f32 0.0, %v860
    %v862 = vpop.f32.mrb[0].mxu0
    %v863 = vpop.f32.mrb[0].mxu0
    %v864 = vadd.f32 0.0, %v863
    %v865 = vpop.f32.mrb[0].mxu0
    %866 = vdwg.mxu0
    %v867 = vadd.f32 %v750, %v861
    %v868 = vadd.f32 %v753, %v864
    %s869 = scalar_lea.vmem [#allocation5], 112
    %v870 = vld [vmem:[%s869] sm:$0xf]
    %v871 = vld [vmem:[%s869 + $0x4] sm:$0xf]
    %v872 = vld [vmem:[%s869 + $0x8] sm:$0xf]
    %v873 = vld [vmem:[%s869 + $0xc] sm:$0xf]
    %v878 = vunpack.c.l.b16 %v870
    %v879 = vunpack.c.l.b16 %v871
    %v880 = vunpack.c.l.b16 %v872
    %v881 = vunpack.c.l.b16 %v873
    %v882 = vpack.c.b16 %v879, %v878
    %v883 = vpack.c.b16 %v881, %v880
    %886 = vmatprep.subr.bf16.mxu0 0
    %887 = vmatpush1.bf16.msra.mxu0 %v882
    %888 = vmatprep.subr.bf16.mxu0 0
    %889 = vmatpush1.bf16.msra.mxu0 %v883
    %890 = vmatprep.subr.bf16.mxu0 0
    %891 = vmatpush1.bf16.msra.mxu0 0
    %892 = vmatprep.subr.bf16.mxu0 0
    %893 = vmatpush1.bf16.msra.mxu0 0
    %894 = vmatprep.subr.bf16.mxu0 0
    %895 = vmatpush1.bf16.msra.mxu0 0
    %896 = vmatprep.subr.bf16.mxu0 0
    %897 = vmatpush1.bf16.msra.mxu0 0
    %898 = vmatprep.subr.bf16.mxu0 0
    %899 = vmatpush1.bf16.msra.mxu0 0
    %900 = vmatprep.subr.bf16.mxu0 0
    %901 = vmatpush1.bf16.msra.mxu0 0
    %902 = vmatprep.subr.bf16.mxu0 0
    %903 = vmatpush1.bf16.msra.mxu0 0
    %904 = vmatprep.subr.bf16.mxu0 0
    %905 = vmatpush1.bf16.msra.mxu0 0
    %906 = vmatprep.subr.bf16.mxu0 0
    %907 = vmatpush1.bf16.msra.mxu0 0
    %908 = vmatprep.subr.bf16.mxu0 0
    %909 = vmatpush1.bf16.msra.mxu0 0
    %910 = vmatprep.subr.bf16.mxu0 0
    %911 = vmatpush1.bf16.msra.mxu0 0
    %912 = vmatprep.subr.bf16.mxu0 0
    %913 = vmatpush1.bf16.msra.mxu0 0
    %914 = vmatprep.subr.bf16.mxu0 0
    %915 = vmatpush1.bf16.msra.mxu0 0
    %916 = vmatprep.subr.bf16.mxu0 0
    %917 = vmatpush1.bf16.msra.mxu0 0
    %918 = vmatprep.mubr.bf16.mxu0 0
    %919 = vmatmul.mubr.bf16.gmra.mrb[0].mxu0 %v713
    %v920 = vpop.f32.mrb[0].mxu0
    %v921 = vadd.f32 0.0, %v920
    %v922 = vpop.f32.mrb[0].mxu0
    %v923 = vpop.f32.mrb[0].mxu0
    %v924 = vadd.f32 0.0, %v923
    %v925 = vpop.f32.mrb[0].mxu0
    %926 = vdwg.mxu0
    %s927 = scalar_lea.vmem [#allocation2], 40
    %v928 = vld [vmem:[%s927] sm:$0xf]
    %v929 = vld [vmem:[%s927 + $0x4] sm:$0xf]
    %v930 = vpack.c.bf16 %v924, %v921
    %v933 = vunpack.c.l.b16 %v928
    %v934 = vunpack.c.l.b16 %v929
    %v935 = vpack.c.b16 %v934, %v933
    %v937 = vsel %vm226, %v935, 0
    %939 = vmatprep.subr.bf16.mxu0 0
    %940 = vmatpush1.bf16.msra.mxu0 %v930
    %941 = vmatprep.subr.bf16.mxu0 0
    %942 = vmatpush1.bf16.msra.mxu0 0
    %943 = vmatprep.subr.bf16.mxu0 0
    %944 = vmatpush1.bf16.msra.mxu0 0
    %945 = vmatprep.subr.bf16.mxu0 0
    %946 = vmatpush1.bf16.msra.mxu0 0
    %947 = vmatprep.subr.bf16.mxu0 0
    %948 = vmatpush1.bf16.msra.mxu0 0
    %949 = vmatprep.subr.bf16.mxu0 0
    %950 = vmatpush1.bf16.msra.mxu0 0
    %951 = vmatprep.subr.bf16.mxu0 0
    %952 = vmatpush1.bf16.msra.mxu0 0
    %953 = vmatprep.subr.bf16.mxu0 0
    %954 = vmatpush1.bf16.msra.mxu0 0
    %955 = vmatprep.subr.bf16.mxu0 0
    %956 = vmatpush1.bf16.msra.mxu0 0
    %957 = vmatprep.subr.bf16.mxu0 0
    %958 = vmatpush1.bf16.msra.mxu0 0
    %959 = vmatprep.subr.bf16.mxu0 0
    %960 = vmatpush1.bf16.msra.mxu0 0
    %961 = vmatprep.subr.bf16.mxu0 0
    %962 = vmatpush1.bf16.msra.mxu0 0
    %963 = vmatprep.subr.bf16.mxu0 0
    %964 = vmatpush1.bf16.msra.mxu0 0
    %965 = vmatprep.subr.bf16.mxu0 0
    %966 = vmatpush1.bf16.msra.mxu0 0
    %967 = vmatprep.subr.bf16.mxu0 0
    %968 = vmatpush1.bf16.msra.mxu0 0
    %969 = vmatprep.subr.bf16.mxu0 0
    %970 = vmatpush1.bf16.msra.mxu0 0
    %971 = vmatprep.mubr.bf16.mxu0 0
    %972 = vmatmul.mubr.bf16.gmra.mrb[0].mxu0 %v937
    %v973 = vpop.f32.mrb[0].mxu0
    %v974 = vadd.f32 0.0, %v973
    %v975 = vpop.f32.mrb[0].mxu0
    %v976 = vpop.f32.mrb[0].mxu0
    %v977 = vadd.f32 0.0, %v976
    %v978 = vpop.f32.mrb[0].mxu0
    %979 = vdwg.mxu0
    %v980 = vadd.f32 %v867, %v974
    %v981 = vadd.f32 %v868, %v977
    %v982 = vtanh.pop %v980
    %v983 = vtanh.pop %v981
    %v984 = vld [vmem:[#allocation8] sm:$0x1]
    %v985 = vld [vmem:[%s4] sm:$0xf]
    %v986 = vld [vmem:[%s4 + $0x4] sm:$0xf]
    %v987 = vld [vmem:[%s4 + $0x8] sm:$0xf]
    %v988 = vld [vmem:[%s4 + $0xc] sm:$0xf]
    %v993 = vunpack.c.l.b16 %v985
    %v994 = vunpack.c.l.b16 %v986
    %v995 = vunpack.c.l.b16 %v987
    %v996 = vunpack.c.l.b16 %v988
    %v997 = vpack.c.b16 %v994, %v993
    %v998 = vpack.c.b16 %v996, %v995
    %1001 = vmatprep.subr.bf16.mxu0 0
    %1002 = vmatpush1.bf16.msra.mxu0 %v997
    %1003 = vmatprep.subr.bf16.mxu0 0
    %1004 = vmatpush1.bf16.msra.mxu0 %v998
    %1005 = vmatprep.subr.bf16.mxu0 0
    %1006 = vmatpush1.bf16.msra.mxu0 0
    %1007 = vmatprep.subr.bf16.mxu0 0
    %1008 = vmatpush1.bf16.msra.mxu0 0
    %1009 = vmatprep.subr.bf16.mxu0 0
    %1010 = vmatpush1.bf16.msra.mxu0 0
    %1011 = vmatprep.subr.bf16.mxu0 0
    %1012 = vmatpush1.bf16.msra.mxu0 0
    %1013 = vmatprep.subr.bf16.mxu0 0
    %1014 = vmatpush1.bf16.msra.mxu0 0
    %1015 = vmatprep.subr.bf16.mxu0 0
    %1016 = vmatpush1.bf16.msra.mxu0 0
    %1017 = vmatprep.subr.bf16.mxu0 0
    %1018 = vmatpush1.bf16.msra.mxu0 0
    %1019 = vmatprep.subr.bf16.mxu0 0
    %1020 = vmatpush1.bf16.msra.mxu0 0
    %1021 = vmatprep.subr.bf16.mxu0 0
    %1022 = vmatpush1.bf16.msra.mxu0 0
    %1023 = vmatprep.subr.bf16.mxu0 0
    %1024 = vmatpush1.bf16.msra.mxu0 0
    %1025 = vmatprep.subr.bf16.mxu0 0
    %1026 = vmatpush1.bf16.msra.mxu0 0
    %1027 = vmatprep.subr.bf16.mxu0 0
    %1028 = vmatpush1.bf16.msra.mxu0 0
    %1029 = vmatprep.subr.bf16.mxu0 0
    %1030 = vmatpush1.bf16.msra.mxu0 0
    %1031 = vmatprep.subr.bf16.mxu0 0
    %1032 = vmatpush1.bf16.msra.mxu0 0
    %1033 = vmatprep.mubr.bf16.mxu0 0
    %1034 = vmatmul.mubr.bf16.gmra.mrb[0].mxu0 %v415
    %v1035 = vpop.f32.mrb[0].mxu0
    %v1036 = vadd.f32 0.0, %v1035
    %v1037 = vpop.f32.mrb[0].mxu0
    %v1038 = vpop.f32.mrb[0].mxu0
    %v1039 = vadd.f32 0.0, %v1038
    %v1040 = vpop.f32.mrb[0].mxu0
    %1041 = vdwg.mxu0
    %v1043 = vlaneseq
    %v1044 = vshrl.u32 %v1043, 7
    %v1045 = vsub.s32 0, %v1044
    %v1046 = vrot.slane %v984, %v1045
    %v1048 = vadd.f32 %v1046, %v1036
    %v1049 = vadd.f32 %v1046, %v1039
    %v1050 = vld [vmem:[%s4 + $0x10] sm:$0xf]
    %v1051 = vld [vmem:[%s4 + $0x14] sm:$0xf]
    %v1052 = vld [vmem:[%s4 + $0x18] sm:$0xf]
    %v1053 = vld [vmem:[%s4 + $0x1c] sm:$0xf]
    %v1058 = vunpack.c.l.b16 %v1050
    %v1059 = vunpack.c.l.b16 %v1051
    %v1060 = vunpack.c.l.b16 %v1052
    %v1061 = vunpack.c.l.b16 %v1053
    %v1062 = vpack.c.b16 %v1059, %v1058
    %v1063 = vpack.c.b16 %v1061, %v1060
    %1066 = vmatprep.subr.bf16.mxu0 0
    %1067 = vmatpush1.bf16.msra.mxu0 %v1062
    %1068 = vmatprep.subr.bf16.mxu0 0
    %1069 = vmatpush1.bf16.msra.mxu0 %v1063
    %1070 = vmatprep.subr.bf16.mxu0 0
    %1071 = vmatpush1.bf16.msra.mxu0 0
    %1072 = vmatprep.subr.bf16.mxu0 0
    %1073 = vmatpush1.bf16.msra.mxu0 0
    %1074 = vmatprep.subr.bf16.mxu0 0
    %1075 = vmatpush1.bf16.msra.mxu0 0
    %1076 = vmatprep.subr.bf16.mxu0 0
    %1077 = vmatpush1.bf16.msra.mxu0 0
    %1078 = vmatprep.subr.bf16.mxu0 0
    %1079 = vmatpush1.bf16.msra.mxu0 0
    %1080 = vmatprep.subr.bf16.mxu0 0
    %1081 = vmatpush1.bf16.msra.mxu0 0
    %1082 = vmatprep.subr.bf16.mxu0 0
    %1083 = vmatpush1.bf16.msra.mxu0 0
    %1084 = vmatprep.subr.bf16.mxu0 0
    %1085 = vmatpush1.bf16.msra.mxu0 0
    %1086 = vmatprep.subr.bf16.mxu0 0
    %1087 = vmatpush1.bf16.msra.mxu0 0
    %1088 = vmatprep.subr.bf16.mxu0 0
    %1089 = vmatpush1.bf16.msra.mxu0 0
    %1090 = vmatprep.subr.bf16.mxu0 0
    %1091 = vmatpush1.bf16.msra.mxu0 0
    %1092 = vmatprep.subr.bf16.mxu0 0
    %1093 = vmatpush1.bf16.msra.mxu0 0
    %1094 = vmatprep.subr.bf16.mxu0 0
    %1095 = vmatpush1.bf16.msra.mxu0 0
    %1096 = vmatprep.subr.bf16.mxu0 0
    %1097 = vmatpush1.bf16.msra.mxu0 0
    %1098 = vmatprep.mubr.bf16.mxu0 0
    %1099 = vmatmul.mubr.bf16.gmra.mrb[0].mxu0 %v713
    %v1100 = vpop.f32.mrb[0].mxu0
    %v1101 = vadd.f32 0.0, %v1100
    %v1102 = vpop.f32.mrb[0].mxu0
    %v1103 = vpop.f32.mrb[0].mxu0
    %v1104 = vadd.f32 0.0, %v1103
    %v1105 = vpop.f32.mrb[0].mxu0
    %1106 = vdwg.mxu0
    %v1107 = vadd.f32 %v1048, %v1101
    %v1108 = vadd.f32 %v1049, %v1104
    %v1109 = vpack.c.bf16 %v983, %v982
    %v1110 = vld [vmem:[%s4 + $0x20] sm:$0xf]
    %v1111 = vld [vmem:[%s4 + $0x24] sm:$0xf]
    %v1112 = vld [vmem:[%s4 + $0x28] sm:$0xf]
    %v1113 = vld [vmem:[%s4 + $0x2c] sm:$0xf]
    %v1118 = vunpack.c.l.b16 %v1110
    %v1119 = vunpack.c.l.b16 %v1111
    %v1120 = vunpack.c.l.b16 %v1112
    %v1121 = vunpack.c.l.b16 %v1113
    %v1122 = vpack.c.b16 %v1119, %v1118
    %v1123 = vpack.c.b16 %v1121, %v1120
    %v1127 = vsel %vm116, %v1109, 0
    %1129 = vmatprep.subr.bf16.mxu0 0
    %1130 = vmatpush1.bf16.msra.mxu0 %v1122
    %1131 = vmatprep.subr.bf16.mxu0 0
    %1132 = vmatpush1.bf16.msra.mxu0 %v1123
    %1133 = vmatprep.subr.bf16.mxu0 0
    %1134 = vmatpush1.bf16.msra.mxu0 0
    %1135 = vmatprep.subr.bf16.mxu0 0
    %1136 = vmatpush1.bf16.msra.mxu0 0
    %1137 = vmatprep.subr.bf16.mxu0 0
    %1138 = vmatpush1.bf16.msra.mxu0 0
    %1139 = vmatprep.subr.bf16.mxu0 0
    %1140 = vmatpush1.bf16.msra.mxu0 0
    %1141 = vmatprep.subr.bf16.mxu0 0
    %1142 = vmatpush1.bf16.msra.mxu0 0
    %1143 = vmatprep.subr.bf16.mxu0 0
    %1144 = vmatpush1.bf16.msra.mxu0 0
    %1145 = vmatprep.subr.bf16.mxu0 0
    %1146 = vmatpush1.bf16.msra.mxu0 0
    %1147 = vmatprep.subr.bf16.mxu0 0
    %1148 = vmatpush1.bf16.msra.mxu0 0
    %1149 = vmatprep.subr.bf16.mxu0 0
    %1150 = vmatpush1.bf16.msra.mxu0 0
    %1151 = vmatprep.subr.bf16.mxu0 0
    %1152 = vmatpush1.bf16.msra.mxu0 0
    %1153 = vmatprep.subr.bf16.mxu0 0
    %1154 = vmatpush1.bf16.msra.mxu0 0
    %1155 = vmatprep.subr.bf16.mxu0 0
    %1156 = vmatpush1.bf16.msra.mxu0 0
    %1157 = vmatprep.subr.bf16.mxu0 0
    %1158 = vmatpush1.bf16.msra.mxu0 0
    %1159 = vmatprep.subr.bf16.mxu0 0
    %1160 = vmatpush1.bf16.msra.mxu0 0
    %1161 = vmatprep.mubr.bf16.mxu0 0
    %1162 = vmatmul.mubr.bf16.gmra.mrb[0].mxu0 %v1127
    %v1163 = vpop.f32.mrb[0].mxu0
    %v1164 = vadd.f32 0.0, %v1163
    %v1165 = vpop.f32.mrb[0].mxu0
    %v1166 = vpop.f32.mrb[0].mxu0
    %v1167 = vadd.f32 0.0, %v1166
    %v1168 = vpop.f32.mrb[0].mxu0
    %1169 = vdwg.mxu0
    %v1170 = vadd.f32 %v1107, %v1164
    %v1171 = vadd.f32 %v1108, %v1167
    %v1172 = vmax.f32 %v1170, 0.0
    %v1173 = vmax.f32 %v1171, 0.0
    %v1174 = vpack.c.bf16 %v1173, %v1172
    %v1175 = vld [vmem:[%s6] sm:$0xff]
    %v1176 = vld [vmem:[%s6 + $0x8] sm:$0xff]
    %v1177 = vld [vmem:[%s6 + $0x10] sm:$0xff]
    %v1178 = vld [vmem:[%s6 + $0x18] sm:$0xff]
    %v1179 = vld [vmem:[%s6 + $0x20] sm:$0xff]
    %v1180 = vld [vmem:[%s6 + $0x28] sm:$0xff]
    %v1181 = vld [vmem:[%s6 + $0x30] sm:$0xff]
    %v1182 = vld [vmem:[%s6 + $0x38] sm:$0xff]
    %v1183 = vld [vmem:[%s7] sm:$0x3]
    %v1185 = vlaneseq
    %v1186 = vshrl.u32 %v1185, 7
    %v1187 = vsub.s32 0, %v1186
    %v1188 = vrot.slane %v1183, %v1187
    %v1189 = vlaneseq
    %v1190 = vshrl.u32 %v1189, 7
    %v1191 = vsub.s32 1, %v1190
    %v1192 = vrot.slane %v1183, %v1191
    %v1203 = vunpack.c.l.b16 %v1175
    %v1204 = vunpack.c.h.b16 %v1175
    %v1205 = vunpack.c.l.b16 %v1176
    %v1206 = vunpack.c.h.b16 %v1176
    %v1207 = vunpack.c.l.b16 %v1177
    %v1208 = vunpack.c.h.b16 %v1177
    %v1209 = vunpack.c.l.b16 %v1178
    %v1210 = vunpack.c.h.b16 %v1178
    %v1211 = vunpack.c.l.b16 %v1179
    %v1212 = vunpack.c.h.b16 %v1179
    %v1213 = vunpack.c.l.b16 %v1180
    %v1214 = vunpack.c.h.b16 %v1180
    %v1215 = vunpack.c.l.b16 %v1181
    %v1216 = vunpack.c.h.b16 %v1181
    %v1217 = vunpack.c.l.b16 %v1182
    %v1218 = vunpack.c.h.b16 %v1182
    %v1219 = vpack.c.b16 %v1205, %v1203
    %v1220 = vpack.c.b16 %v1206, %v1204
    %v1221 = vpack.c.b16 %v1209, %v1207
    %v1222 = vpack.c.b16 %v1210, %v1208
    %v1223 = vpack.c.b16 %v1213, %v1211
    %v1224 = vpack.c.b16 %v1214, %v1212
    %v1225 = vpack.c.b16 %v1217, %v1215
    %v1226 = vpack.c.b16 %v1218, %v1216
    %vm1235 = vcmask 523264
    %v1237 = vsel %vm1235, %v1174, 0
    %1239 = vmatprep.subr.bf16.mxu0 %v1220
    %1240 = vmatpush1.bf16.msra.mxu0 %v1219
    %1241 = vmatprep.subr.bf16.mxu0 %v1222
    %1242 = vmatpush1.bf16.msra.mxu0 %v1221
    %1243 = vmatprep.subr.bf16.mxu0 %v1224
    %1244 = vmatpush1.bf16.msra.mxu0 %v1223
    %1245 = vmatprep.subr.bf16.mxu0 %v1226
    %1246 = vmatpush1.bf16.msra.mxu0 %v1225
    %1247 = vmatprep.subr.bf16.mxu0 0
    %1248 = vmatpush1.bf16.msra.mxu0 0
    %1249 = vmatprep.subr.bf16.mxu0 0
    %1250 = vmatpush1.bf16.msra.mxu0 0
    %1251 = vmatprep.subr.bf16.mxu0 0
    %1252 = vmatpush1.bf16.msra.mxu0 0
    %1253 = vmatprep.subr.bf16.mxu0 0
    %1254 = vmatpush1.bf16.msra.mxu0 0
    %1255 = vmatprep.subr.bf16.mxu0 0
    %1256 = vmatpush1.bf16.msra.mxu0 0
    %1257 = vmatprep.subr.bf16.mxu0 0
    %1258 = vmatpush1.bf16.msra.mxu0 0
    %1259 = vmatprep.subr.bf16.mxu0 0
    %1260 = vmatpush1.bf16.msra.mxu0 0
    %1261 = vmatprep.subr.bf16.mxu0 0
    %1262 = vmatpush1.bf16.msra.mxu0 0
    %1263 = vmatprep.subr.bf16.mxu0 0
    %1264 = vmatpush1.bf16.msra.mxu0 0
    %1265 = vmatprep.subr.bf16.mxu0 0
    %1266 = vmatpush1.bf16.msra.mxu0 0
    %1267 = vmatprep.subr.bf16.mxu0 0
    %1268 = vmatpush1.bf16.msra.mxu0 0
    %1269 = vmatprep.subr.bf16.mxu0 0
    %1270 = vmatpush1.bf16.msra.mxu0 0
    %1271 = vmatprep.mubr.bf16.mxu0 0
    %1272 = vmatmul.mubr.bf16.gmra.mrb[0].mxu0 %v1237
    %v1273 = vpop.f32.mrb[0].mxu0
    %v1274 = vadd.f32 %v1188, %v1273
    %v1275 = vpop.f32.mrb[0].mxu0
    %v1276 = vadd.f32 %v1192, %v1275
    %v1277 = vpop.f32.mrb[0].mxu0
    %v1278 = vadd.f32 %v1188, %v1277
    %v1279 = vpop.f32.mrb[0].mxu0
    %v1280 = vadd.f32 %v1192, %v1279
    %1281 = vdwg.mxu0
    %v1282 = vld [vmem:[%s8] sm:$0xff]
    %v1283 = vld [vmem:[%s8 + $0x8] sm:$0xff]
    %v1284 = vmul.f32 %v1276, 1.442695
    %v1285 = vpow.pop %v1284
    %v1286 = vmul.f32 %v1280, 1.442695
    %v1287 = vpow.pop %v1286
    %v1288 = vmul.f32 %v1282, %v1285
    %v1289 = vmul.f32 %v1283, %v1287
    %v1290 = vadd.f32 %v1274, %v1288
    %v1291 = vadd.f32 %v1278, %v1289
    %1292 = vst [vmem:[#allocation10] sm:$0xff] %v1290
    %1293 = vst [vmem:[#allocation10 + $0x8] sm:$0xff] %v1291
    %v1294 = vmul.f32 %v1290, %v1291
    %1295 = vmatprep.subr.mxu0 0.0
    %1296 = vmatpush1.xpose.msra.mxu0 %v1294
    %1297 = vmatprep.subr.mxu0 0.0
    %1298 = vmatpush1.xpose.msra.mxu0 0.0
    %1299 = vmatprep.subr.mxu0 0.0
    %1300 = vmatpush1.xpose.msra.mxu0 0.0
    %1301 = vmatprep.subr.mxu0 0.0
    %1302 = vmatpush1.xpose.msra.mxu0 0.0
    %1303 = vmatprep.subr.mxu0 0.0
    %1304 = vmatpush1.xpose.msra.mxu0 0.0
    %1305 = vmatprep.subr.mxu0 0.0
    %1306 = vmatpush1.xpose.msra.mxu0 0.0
    %1307 = vmatprep.subr.mxu0 0.0
    %1308 = vmatpush1.xpose.msra.mxu0 0.0
    %1309 = vmatprep.subr.mxu0 0.0
    %1310 = vmatpush1.xpose.msra.mxu0 0.0
    %1311 = vmatprep.subr.mxu0 0.0
    %1312 = vmatpush1.xpose.msra.mxu0 0.0
    %1313 = vmatprep.subr.mxu0 0.0
    %1314 = vmatpush1.xpose.msra.mxu0 0.0
    %1315 = vmatprep.subr.mxu0 0.0
    %1316 = vmatpush1.xpose.msra.mxu0 0.0
    %1317 = vmatprep.subr.mxu0 0.0
    %1318 = vmatpush1.xpose.msra.mxu0 0.0
    %1319 = vmatprep.subr.mxu0 0.0
    %1320 = vmatpush1.xpose.msra.mxu0 0.0
    %1321 = vmatprep.subr.mxu0 0.0
    %1322 = vmatpush1.xpose.msra.mxu0 0.0
    %1323 = vmatprep.subr.mxu0 0.0
    %1324 = vmatpush1.xpose.msra.mxu0 0.0
    %1325 = vmatprep.subr.mxu0 0.0
    %1326 = vmatpush1.xpose.msra.mxu0 0.0
    %1327 = vmatprep.subr.mxu0 0.0
    %1328 = vmatpush1.xpose.msra.mxu0 0.0
    %1329 = vmatprep.subr.mxu0 0.0
    %1330 = vmatpush1.xpose.msra.mxu0 0.0
    %1331 = vmatprep.subr.mxu0 0.0
    %1332 = vmatpush1.xpose.msra.mxu0 0.0
    %1333 = vmatprep.subr.mxu0 0.0
    %1334 = vmatpush1.xpose.msra.mxu0 0.0
    %1335 = vmatprep.subr.mxu0 0.0
    %1336 = vmatpush1.xpose.msra.mxu0 0.0
    %1337 = vmatprep.subr.mxu0 0.0
    %1338 = vmatpush1.xpose.msra.mxu0 0.0
    %1339 = vmatprep.subr.mxu0 0.0
    %1340 = vmatpush1.xpose.msra.mxu0 0.0
    %1341 = vmatprep.subr.mxu0 0.0
    %1342 = vmatpush1.xpose.msra.mxu0 0.0
    %1343 = vmatprep.subr.mxu0 0.0
    %1344 = vmatpush1.xpose.msra.mxu0 0.0
    %1345 = vmatprep.subr.mxu0 0.0
    %1346 = vmatpush1.xpose.msra.mxu0 0.0
    %1347 = vmatprep.subr.mxu0 0.0
    %1348 = vmatpush1.xpose.msra.mxu0 0.0
    %1349 = vmatprep.subr.mxu0 0.0
    %1350 = vmatpush1.xpose.msra.mxu0 0.0
    %1351 = vmatprep.subr.mxu0 0.0
    %1352 = vmatpush1.xpose.msra.mxu0 0.0
    %1353 = vmatprep.subr.mxu0 0.0
    %1354 = vmatpush1.xpose.msra.mxu0 0.0
    %1355 = vmatprep.subr.mxu0 0.0
    %1356 = vmatpush1.xpose.msra.mxu0 0.0
    %1357 = vmatprep.subr.mxu0 0.0
    %1358 = vmatpush1.xpose.msra.mxu0 0.0
    %1359 = vmatprep.mubr.f32.mxu0 0.0
    %1360 = vmatmul.mubr.f32.gmra.mrb[0].mxu0 1.0
    %v1361 = vpop.f32.mrb[0].mxu0
    %v1362 = vadd.f32 0.0, %v1361
    %v1363 = vpop.f32.mrb[0].mxu0
    %1364 = vdwg.mxu0
    %vm1365 = vcmask 64512
    %v1366 = vsel %vm1365, %v1362, 0.0
    %1367 = vst [vmem:[%s10] sm:$0x1] %v1366
    // Predicated region
    $region54: #{autoencoder_forward.1} parent=1 // pred_check
      _
    $region55: #{autoencoder_forward.1} parent=1 // pred_check_branch
      %1369 = sbr.rel (0) target = $region57
    $region56: #{autoencoder_forward.1} parent=1 // pred_region
      %s1371 = ssub.s32 256, 256
      %1372 = vsyncadd [#allocation4], %s1371
      %s1373 = sshll.u32 [#allocation10], 4
      %s1374 = int_to_ptr.vmem [resolvable:$true] %s1373
      %1379 = dma.vmem_to_hbm [thread:$0]  %s1374, 256, %s9, [#allocation4], 128, 128, 8
    $region57: #{autoencoder_forward.1} parent=1 // pred_fallthru
      _
    // Predicated region
    $region58: #{autoencoder_forward.1} parent=1 // pred_check
      _
    $region59: #{autoencoder_forward.1} parent=1 // pred_check_branch
      %1381 = sbr.rel (0) target = $region61
    $region60: #{autoencoder_forward.1} parent=1 // pred_region
      _
    $region61: #{autoencoder_forward.1} parent=1 // pred_fallthru
      _
    // Predicated region
    $region62: #{autoencoder_forward.1} parent=1 // pred_check
      _
    $region63: #{autoencoder_forward.1} parent=1 // pred_check_branch
      %1383 = sbr.rel (0) target = $region65
    $region64: #{autoencoder_forward.1} parent=1 // pred_region
      %1384 = dma.done [#allocation4], 256
    $region65: #{autoencoder_forward.1} parent=1 // pred_fallthru
      _
    // Predicated region
    $region66: #{autoencoder_forward.1} parent=1 // pred_check
      _
    $region67: #{autoencoder_forward.1} parent=1 // pred_check_branch
      %1386 = sbr.rel (0) target = $region69
    $region68: #{autoencoder_forward.1} parent=1 // pred_region
      _
    $region69: #{autoencoder_forward.1} parent=1 // pred_fallthru
      _
    %1387 = vsyncpa [#allocation3], 1
    %1388 = vsyncpa [#allocation6], 1
    %1389 = vsyncpa [#allocation9], 1
    %1390 = vsyncpa [#allocation4], 1

</llo_original>
